<compile_context>
chip_gen: v6e
topology: v6e:2x2x1
jax: 0.10.0
libtpu: 0.0.40
codegen_flags: <defaults>
</compile_context>

<pallas_src>
import functools

import jax
import jax.numpy as jnp
from jax.experimental import pallas as pl
from jax.experimental.pallas import tpu as pltpu

EPS = 1e-5  # nn.BatchNorm1d default eps


def _decoder_kernel(num_resblocks, batch, tokens_per_batch,
                    x_ref, cond_ref, we_ref, be_ref,
                    rb_wgb_ref, rb_bgb_ref, rb_wc_ref,
                    fn_wgb_ref, fn_bgb_ref,
                    wo_ref, bo_ref, out_ref):
    B, N = batch, tokens_per_batch
    T = B * N
    C = we_ref.shape[0]

    x = x_ref[...]        # [3, T]
    cond = cond_ref[...]  # [Ccond, B]  (per-batch conditioning, not per-token)

    # One-hot batch expansion matrix E[b, t] = 1 iff token t belongs to batch b.
    tok = jax.lax.broadcasted_iota(jnp.int32, (B, T), 1)
    row = jax.lax.broadcasted_iota(jnp.int32, (B, T), 0)
    lo = row * N
    expand = ((tok >= lo) & (tok < lo + N)).astype(jnp.float32)  # [B, T]

    # Embedder Conv1d(3 -> C, k=1, bias): 3 broadcast FMAs on the VPU
    # (no degenerate K=3 MXU matmul, no channel zero-padding).
    we = we_ref[...]  # [C, 3]
    h = (be_ref[...]
         + we[:, 0:1] * x[0:1, :]
         + we[:, 1:2] * x[1:2, :]
         + we[:, 2:3] * x[2:3, :])          # [C, T] f32

    inv_T = 1.0 / T

    def ada_bn(h, wgb, bgb):
        # Single-pass stats (sum / sum-of-squares) + single-FMA apply.
        s1 = jnp.sum(h, axis=1, keepdims=True)           # [C, 1]
        s2 = jnp.sum(h * h, axis=1, keepdims=True)       # [C, 1]
        mean = s1 * inv_T
        var = jnp.maximum(s2 * inv_T - mean * mean, 0.0)
        inv_std = jax.lax.rsqrt(var + EPS)               # [C, 1]  (EUP slot)
        # Fused gamma|beta conv: one [2C, Ccond] @ [Ccond, B] dot.
        gb = jnp.dot(wgb, cond, preferred_element_type=jnp.float32) + bgb   # [2C, B]
        scale = gb[:C, :] * inv_std                      # [C, B]
        shift = gb[C:, :] - mean * scale                 # [C, B]
        # Expand per-batch scale/shift to per-token [C, T] via the one-hot matmul.
        ss = jnp.concatenate([scale, shift], axis=0)                           # [2C, B]
        ss_t = jnp.dot(ss, expand, preferred_element_type=jnp.float32)         # [2C, T]
        return h * ss_t[:C, :] + ss_t[C:, :]

    # AdaResBlocks (in_channels == out_channels required by the residual add)
    for r in range(num_resblocks):
        res = h
        for blk in range(2):  # first_block, second_block
            h = ada_bn(h, rb_wgb_ref[r, blk], rb_bgb_ref[r, blk])
            h = jnp.maximum(h, 0.0)                                       # ReLU
            # Conv1d(C->C, k=1, no bias): bf16 operands, f32 accumulation.
            h = jnp.dot(rb_wc_ref[r, blk], h.astype(jnp.bfloat16),
                        preferred_element_type=jnp.float32)               # [C, T]
        h = res + h

    # Final AdaBatchNorm + head: ReLU -> Conv1d(C -> 1, bias) -> Sigmoid
    h = ada_bn(h, fn_wgb_ref[...], fn_bgb_ref[...])
    h = jnp.maximum(h, 0.0)
    # Head as VPU multiply + sublane (channel) reduction -> lane-dense [1, T] output.
    o = jnp.sum(h * wo_ref[...], axis=0, keepdims=True) + bo_ref[...]     # [1, T]
    out_ref[...] = jax.nn.sigmoid(o)


def ada_decoder(x, cond, params):
    """x: [B, 3, N] float32, cond: [B, Ccond, 1] float32 -> [B, N] float32."""
    B, cin, N = x.shape
    T = B * N

    # Channel-on-sublane / token-on-lane layout: token t = b*N + n.
    x_ct = jnp.transpose(x, (1, 0, 2)).reshape(cin, T)   # [3, T]
    cond_cb = jnp.transpose(cond[:, :, 0])               # [Ccond, B] — per batch, not per token

    num_resblocks = params["rb_wgb"].shape[0]
    kernel = functools.partial(_decoder_kernel, num_resblocks, B, N)
    vmem = pl.BlockSpec(memory_space=pltpu.MemorySpace.VMEM)

    args = (x_ct, cond_cb, params["we"], params["be"],
            params["rb_wgb"], params["rb_bgb"], params["rb_wc"],
            params["fn_wgb"], params["fn_bgb"],
            params["wo"], params["bo"])

    # TODO(synk): for large T, add a token-tiled grid with a two-phase (stats-accumulate,
    # apply) BatchNorm per AdaBN; this fused single-block version assumes all activations
    # fit in scoped VMEM (tightest constraint on v7x's 64 MiB).
    out = pl.pallas_call(
        kernel,
        out_shape=jax.ShapeDtypeStruct((1, T), jnp.float32),   # lane-dense output slab
        in_specs=[vmem] * len(args),
        out_specs=vmem,
        compiler_params=pltpu.CompilerParams(
            vmem_limit_bytes=48 * 1024 * 1024),  # above v5e's 16 MiB default, below v7x physical
    )(*args)

    # PyTorch: x = self.conv(x).squeeze() on [B, 1, N] -> [B, N]
    return out.reshape(B, N)


def init_params(key, c_hidden, c_cond, num_resblocks, cin=3):
    """Deterministic synthetic parameters. Conv weights stored PyTorch-style [Cout, Cin]."""
    C, R = c_hidden, num_resblocks
    keys = jax.random.split(key, 13)
    s = 0.1
    nrm = lambda k, shp: s * jax.random.normal(k, shp, jnp.float32)

    rb_wg = nrm(keys[2], (R, 2, C, c_cond))
    rb_wb = nrm(keys[3], (R, 2, C, c_cond))
    rb_bg = 1.0 + nrm(keys[4], (R, 2, C, 1))
    rb_bb = nrm(keys[5], (R, 2, C, 1))
    fn_wg = nrm(keys[6], (C, c_cond))
    fn_wb = nrm(keys[7], (C, c_cond))
    fn_bg = 1.0 + nrm(keys[8], (C, 1))
    fn_bb = nrm(keys[9], (C, 1))

    return dict(
        we=nrm(keys[0], (C, cin)),                          # embedder weight [C, 3]
        be=nrm(keys[1], (C, 1)),                            # embedder bias
        # gamma|beta fused along the output-channel (sublane) axis -> one dot per AdaBN
        rb_wgb=jnp.concatenate([rb_wg, rb_wb], axis=2),     # [R, 2, 2C, Ccond]
        rb_bgb=jnp.concatenate([rb_bg, rb_bb], axis=2),     # [R, 2, 2C, 1]
        # resblock C->C conv weights kept in bf16 (halves weight DMA; f32 MXU accumulation)
        rb_wc=nrm(keys[10], (R, 2, C, C)).astype(jnp.bfloat16),
        fn_wgb=jnp.concatenate([fn_wg, fn_wb], axis=0),     # [2C, Ccond]
        fn_bgb=jnp.concatenate([fn_bg, fn_bb], axis=0),     # [2C, 1]
        wo=nrm(keys[11], (C, 1)),                           # head conv weight
        bo=nrm(keys[12], (1, 1)),                           # head conv bias
    )


if __name__ == "__main__":
    # Implied config:
    #   embed_param = dict(in_channels=3, out_channels=32, kernel_size=1)
    #   cond_params = [dict(in_channels=32, out_channels=32, cond_channels=8)] * 2
    #   conv_param  = dict(in_channels=32, out_channels=1, kernel_size=1)
    B, N = 2, 128                 # T = B*N = 256 tokens -> lane-dense vregs
    CIN, C, CCOND, R = 3, 32, 8, 2

    key = jax.random.PRNGKey(0)
    kx, kc, kp = jax.random.split(key, 3)
    x = jax.random.normal(kx, (B, CIN, N), jnp.float32)       # positions [B, 3, N]
    cond = jax.random.normal(kc, (B, CCOND, 1), jnp.float32)  # conditioning [B, Ccond, 1]
    params = init_params(kp, C, CCOND, R, cin=CIN)

    out = jax.block_until_ready(ada_decoder(x, cond, params))
    assert out.shape == (B, N)
    assert bool(jnp.all(jnp.isfinite(out)))
    print("KERNEL_OK")
</pallas_src>

<mosaic_0001>
module attributes {stable_mosaic.version = 11 : i64} {
  func.func @_decoder_kernel(%arg0: memref<3x256xf32, #tpu.memory_space<vmem>>, %arg1: memref<8x2xf32, #tpu.memory_space<vmem>>, %arg2: memref<32x3xf32, #tpu.memory_space<vmem>>, %arg3: memref<32x1xf32, #tpu.memory_space<vmem>>, %arg4: memref<2x2x64x8xf32, #tpu.memory_space<vmem>>, %arg5: memref<2x2x64x1xf32, #tpu.memory_space<vmem>>, %arg6: memref<2x2x32x32xbf16, #tpu.memory_space<vmem>>, %arg7: memref<64x8xf32, #tpu.memory_space<vmem>>, %arg8: memref<64x1xf32, #tpu.memory_space<vmem>>, %arg9: memref<32x1xf32, #tpu.memory_space<vmem>>, %arg10: memref<1x1xf32, #tpu.memory_space<vmem>>, %arg11: memref<1x256xf32, #tpu.memory_space<vmem>>) attributes {dimension_semantics = [], scalar_prefetch = 0 : i64, scratch_operands = 0 : i64, tpu.core_type = #tpu.core_type<tc>} {
    %c0 = arith.constant 0 : index
    %c0_0 = arith.constant 0 : index
    %0 = vector.load %arg0[%c0, %c0_0] : memref<3x256xf32, #tpu.memory_space<vmem>>, vector<3x256xf32>
    %c0_1 = arith.constant 0 : index
    %c0_2 = arith.constant 0 : index
    %1 = vector.load %arg1[%c0_1, %c0_2] : memref<8x2xf32, #tpu.memory_space<vmem>>, vector<8x2xf32>
    %2 = tpu.iota {dimensions = array<i32: 1>} : vector<2x256xi32>
    %3 = tpu.iota {dimensions = array<i32: 0>} : vector<2x256xi32>
    %c128_i32 = arith.constant 128 : i32
    %4 = vector.broadcast %c128_i32 : i32 to vector<2x256xi32>
    %5 = arith.muli %3, %4 : vector<2x256xi32>
    %6 = arith.cmpi sge, %2, %5 : vector<2x256xi32>
    %c128_i32_3 = arith.constant 128 : i32
    %7 = vector.broadcast %c128_i32_3 : i32 to vector<2x256xi32>
    %8 = arith.addi %5, %7 : vector<2x256xi32>
    %9 = arith.cmpi slt, %2, %8 : vector<2x256xi32>
    %10 = arith.andi %6, %9 : vector<2x256xi1>
    %11 = arith.extui %10 : vector<2x256xi1> to vector<2x256xi32>
    %12 = arith.sitofp %11 : vector<2x256xi32> to vector<2x256xf32>
    %c0_4 = arith.constant 0 : index
    %c0_5 = arith.constant 0 : index
    %13 = vector.load %arg2[%c0_4, %c0_5] : memref<32x3xf32, #tpu.memory_space<vmem>>, vector<32x3xf32>
    %c0_6 = arith.constant 0 : index
    %c0_7 = arith.constant 0 : index
    %14 = vector.load %arg3[%c0_6, %c0_7] : memref<32x1xf32, #tpu.memory_space<vmem>>, vector<32x1xf32>
    %15 = vector.extract_strided_slice %13 {offsets = [0, 0], sizes = [32, 1], strides = [1, 1]} : vector<32x3xf32> to vector<32x1xf32>
    %16 = vector.extract_strided_slice %0 {offsets = [0, 0], sizes = [1, 256], strides = [1, 1]} : vector<3x256xf32> to vector<1x256xf32>
    %17 = vector.broadcast %15 : vector<32x1xf32> to vector<32x256xf32>
    %18 = vector.broadcast %16 : vector<1x256xf32> to vector<32x256xf32>
    %19 = arith.mulf %17, %18 : vector<32x256xf32>
    %20 = vector.broadcast %14 : vector<32x1xf32> to vector<32x256xf32>
    %21 = arith.addf %20, %19 : vector<32x256xf32>
    %22 = vector.extract_strided_slice %13 {offsets = [0, 1], sizes = [32, 1], strides = [1, 1]} : vector<32x3xf32> to vector<32x1xf32>
    %23 = vector.extract_strided_slice %0 {offsets = [1, 0], sizes = [1, 256], strides = [1, 1]} : vector<3x256xf32> to vector<1x256xf32>
    %24 = vector.broadcast %22 : vector<32x1xf32> to vector<32x256xf32>
    %25 = vector.broadcast %23 : vector<1x256xf32> to vector<32x256xf32>
    %26 = arith.mulf %24, %25 : vector<32x256xf32>
    %27 = arith.addf %21, %26 : vector<32x256xf32>
    %28 = vector.extract_strided_slice %13 {offsets = [0, 2], sizes = [32, 1], strides = [1, 1]} : vector<32x3xf32> to vector<32x1xf32>
    %29 = vector.extract_strided_slice %0 {offsets = [2, 0], sizes = [1, 256], strides = [1, 1]} : vector<3x256xf32> to vector<1x256xf32>
    %30 = vector.broadcast %28 : vector<32x1xf32> to vector<32x256xf32>
    %31 = vector.broadcast %29 : vector<1x256xf32> to vector<32x256xf32>
    %32 = arith.mulf %30, %31 : vector<32x256xf32>
    %33 = arith.addf %27, %32 : vector<32x256xf32>
    %c0_8 = arith.constant 0 : index
    %c0_9 = arith.constant 0 : index
    %c0_10 = arith.constant 0 : index
    %c0_11 = arith.constant 0 : index
    %34 = vector.load %arg4[%c0_8, %c0_9, %c0_10, %c0_11] : memref<2x2x64x8xf32, #tpu.memory_space<vmem>>, vector<1x1x64x8xf32>
    %35 = vector.shape_cast %34 : vector<1x1x64x8xf32> to vector<64x8xf32>
    %c0_12 = arith.constant 0 : index
    %c0_13 = arith.constant 0 : index
    %c0_14 = arith.constant 0 : index
    %c0_15 = arith.constant 0 : index
    %36 = vector.load %arg5[%c0_12, %c0_13, %c0_14, %c0_15] : memref<2x2x64x1xf32, #tpu.memory_space<vmem>>, vector<1x1x64x1xf32>
    %37 = vector.shape_cast %36 : vector<1x1x64x1xf32> to vector<64x1xf32>
    %cst = arith.constant dense<0.000000e+00> : vector<32xf32>
    %38 = vector.multi_reduction <add>, %33, %cst [1] : vector<32x256xf32> to vector<32xf32>
    %39 = vector.shape_cast %38 : vector<32xf32> to vector<32x1xf32>
    %40 = arith.mulf %33, %33 : vector<32x256xf32>
    %cst_16 = arith.constant dense<0.000000e+00> : vector<32xf32>
    %41 = vector.multi_reduction <add>, %40, %cst_16 [1] : vector<32x256xf32> to vector<32xf32>
    %42 = vector.shape_cast %41 : vector<32xf32> to vector<32x1xf32>
    %cst_17 = arith.constant 3.906250e-03 : f32
    %43 = vector.broadcast %cst_17 : f32 to vector<32x1xf32>
    %44 = arith.mulf %39, %43 : vector<32x1xf32>
    %cst_18 = arith.constant 3.906250e-03 : f32
    %45 = vector.broadcast %cst_18 : f32 to vector<32x1xf32>
    %46 = arith.mulf %42, %45 : vector<32x1xf32>
    %47 = arith.mulf %44, %44 : vector<32x1xf32>
    %48 = arith.subf %46, %47 : vector<32x1xf32>
    %cst_19 = arith.constant 0.000000e+00 : f32
    %49 = vector.broadcast %cst_19 : f32 to vector<32x1xf32>
    %50 = arith.maximumf %48, %49 : vector<32x1xf32>
    %cst_20 = arith.constant 9.99999974E-6 : f32
    %51 = vector.broadcast %cst_20 : f32 to vector<32x1xf32>
    %52 = arith.addf %50, %51 : vector<32x1xf32>
    %53 = math.rsqrt %52 : vector<32x1xf32>
    %cst_21 = arith.constant dense<0.000000e+00> : vector<64x2xf32>
    %54 = tpu.matmul %35, %1, %cst_21 {dimension_numbers = #tpu.dot_dimension_numbers<[1], [0], [0], [1], [0, 0, 1, 1], [], []>} : vector<64x8xf32>, vector<8x2xf32>, vector<64x2xf32> -> vector<64x2xf32>
    %55 = vector.broadcast %37 : vector<64x1xf32> to vector<64x2xf32>
    %56 = arith.addf %54, %55 : vector<64x2xf32>
    %57 = vector.extract_strided_slice %56 {offsets = [0, 0], sizes = [32, 2], strides = [1, 1]} : vector<64x2xf32> to vector<32x2xf32>
    %58 = vector.broadcast %53 : vector<32x1xf32> to vector<32x2xf32>
    %59 = arith.mulf %57, %58 : vector<32x2xf32>
    %60 = vector.extract_strided_slice %56 {offsets = [32, 0], sizes = [32, 2], strides = [1, 1]} : vector<64x2xf32> to vector<32x2xf32>
    %61 = vector.broadcast %44 : vector<32x1xf32> to vector<32x2xf32>
    %62 = arith.mulf %61, %59 : vector<32x2xf32>
    %63 = arith.subf %60, %62 : vector<32x2xf32>
    %64 = tpu.concatenate %59, %63 in 0 : vector<32x2xf32>, vector<32x2xf32> -> vector<64x2xf32>
    %cst_22 = arith.constant dense<0.000000e+00> : vector<64x256xf32>
    %65 = tpu.matmul %64, %12, %cst_22 {dimension_numbers = #tpu.dot_dimension_numbers<[1], [0], [0], [1], [0, 0, 1, 1], [], []>} : vector<64x2xf32>, vector<2x256xf32>, vector<64x256xf32> -> vector<64x256xf32>
    %66 = vector.extract_strided_slice %65 {offsets = [0, 0], sizes = [32, 256], strides = [1, 1]} : vector<64x256xf32> to vector<32x256xf32>
    %67 = arith.mulf %33, %66 : vector<32x256xf32>
    %68 = vector.extract_strided_slice %65 {offsets = [32, 0], sizes = [32, 256], strides = [1, 1]} : vector<64x256xf32> to vector<32x256xf32>
    %69 = arith.addf %67, %68 : vector<32x256xf32>
    %cst_23 = arith.constant 0.000000e+00 : f32
    %70 = vector.broadcast %cst_23 : f32 to vector<32x256xf32>
    %71 = arith.maximumf %69, %70 : vector<32x256xf32>
    %c0_24 = arith.constant 0 : index
    %c0_25 = arith.constant 0 : index
    %c0_26 = arith.constant 0 : index
    %c0_27 = arith.constant 0 : index
    %72 = vector.load %arg6[%c0_24, %c0_25, %c0_26, %c0_27] : memref<2x2x32x32xbf16, #tpu.memory_space<vmem>>, vector<1x1x32x32xbf16>
    %73 = vector.shape_cast %72 : vector<1x1x32x32xbf16> to vector<32x32xbf16>
    %74 = arith.truncf %71 : vector<32x256xf32> to vector<32x256xbf16>
    %cst_28 = arith.constant dense<0.000000e+00> : vector<32x256xf32>
    %75 = tpu.matmul %73, %74, %cst_28 {dimension_numbers = #tpu.dot_dimension_numbers<[1], [0], [0], [1], [0, 0, 1, 1], [], []>} : vector<32x32xbf16>, vector<32x256xbf16>, vector<32x256xf32> -> vector<32x256xf32>
    %c0_29 = arith.constant 0 : index
    %c1 = arith.constant 1 : index
    %c0_30 = arith.constant 0 : index
    %c0_31 = arith.constant 0 : index
    %76 = vector.load %arg4[%c0_29, %c1, %c0_30, %c0_31] : memref<2x2x64x8xf32, #tpu.memory_space<vmem>>, vector<1x1x64x8xf32>
    %77 = vector.shape_cast %76 : vector<1x1x64x8xf32> to vector<64x8xf32>
    %c0_32 = arith.constant 0 : index
    %c1_33 = arith.constant 1 : index
    %c0_34 = arith.constant 0 : index
    %c0_35 = arith.constant 0 : index
    %78 = vector.load %arg5[%c0_32, %c1_33, %c0_34, %c0_35] : memref<2x2x64x1xf32, #tpu.memory_space<vmem>>, vector<1x1x64x1xf32>
    %79 = vector.shape_cast %78 : vector<1x1x64x1xf32> to vector<64x1xf32>
    %cst_36 = arith.constant dense<0.000000e+00> : vector<32xf32>
    %80 = vector.multi_reduction <add>, %75, %cst_36 [1] : vector<32x256xf32> to vector<32xf32>
    %81 = vector.shape_cast %80 : vector<32xf32> to vector<32x1xf32>
    %82 = arith.mulf %75, %75 : vector<32x256xf32>
    %cst_37 = arith.constant dense<0.000000e+00> : vector<32xf32>
    %83 = vector.multi_reduction <add>, %82, %cst_37 [1] : vector<32x256xf32> to vector<32xf32>
    %84 = vector.shape_cast %83 : vector<32xf32> to vector<32x1xf32>
    %cst_38 = arith.constant 3.906250e-03 : f32
    %85 = vector.broadcast %cst_38 : f32 to vector<32x1xf32>
    %86 = arith.mulf %81, %85 : vector<32x1xf32>
    %cst_39 = arith.constant 3.906250e-03 : f32
    %87 = vector.broadcast %cst_39 : f32 to vector<32x1xf32>
    %88 = arith.mulf %84, %87 : vector<32x1xf32>
    %89 = arith.mulf %86, %86 : vector<32x1xf32>
    %90 = arith.subf %88, %89 : vector<32x1xf32>
    %cst_40 = arith.constant 0.000000e+00 : f32
    %91 = vector.broadcast %cst_40 : f32 to vector<32x1xf32>
    %92 = arith.maximumf %90, %91 : vector<32x1xf32>
    %cst_41 = arith.constant 9.99999974E-6 : f32
    %93 = vector.broadcast %cst_41 : f32 to vector<32x1xf32>
    %94 = arith.addf %92, %93 : vector<32x1xf32>
    %95 = math.rsqrt %94 : vector<32x1xf32>
    %cst_42 = arith.constant dense<0.000000e+00> : vector<64x2xf32>
    %96 = tpu.matmul %77, %1, %cst_42 {dimension_numbers = #tpu.dot_dimension_numbers<[1], [0], [0], [1], [0, 0, 1, 1], [], []>} : vector<64x8xf32>, vector<8x2xf32>, vector<64x2xf32> -> vector<64x2xf32>
    %97 = vector.broadcast %79 : vector<64x1xf32> to vector<64x2xf32>
    %98 = arith.addf %96, %97 : vector<64x2xf32>
    %99 = vector.extract_strided_slice %98 {offsets = [0, 0], sizes = [32, 2], strides = [1, 1]} : vector<64x2xf32> to vector<32x2xf32>
    %100 = vector.broadcast %95 : vector<32x1xf32> to vector<32x2xf32>
    %101 = arith.mulf %99, %100 : vector<32x2xf32>
    %102 = vector.extract_strided_slice %98 {offsets = [32, 0], sizes = [32, 2], strides = [1, 1]} : vector<64x2xf32> to vector<32x2xf32>
    %103 = vector.broadcast %86 : vector<32x1xf32> to vector<32x2xf32>
    %104 = arith.mulf %103, %101 : vector<32x2xf32>
    %105 = arith.subf %102, %104 : vector<32x2xf32>
    %106 = tpu.concatenate %101, %105 in 0 : vector<32x2xf32>, vector<32x2xf32> -> vector<64x2xf32>
    %cst_43 = arith.constant dense<0.000000e+00> : vector<64x256xf32>
    %107 = tpu.matmul %106, %12, %cst_43 {dimension_numbers = #tpu.dot_dimension_numbers<[1], [0], [0], [1], [0, 0, 1, 1], [], []>} : vector<64x2xf32>, vector<2x256xf32>, vector<64x256xf32> -> vector<64x256xf32>
    %108 = vector.extract_strided_slice %107 {offsets = [0, 0], sizes = [32, 256], strides = [1, 1]} : vector<64x256xf32> to vector<32x256xf32>
    %109 = arith.mulf %75, %108 : vector<32x256xf32>
    %110 = vector.extract_strided_slice %107 {offsets = [32, 0], sizes = [32, 256], strides = [1, 1]} : vector<64x256xf32> to vector<32x256xf32>
    %111 = arith.addf %109, %110 : vector<32x256xf32>
    %cst_44 = arith.constant 0.000000e+00 : f32
    %112 = vector.broadcast %cst_44 : f32 to vector<32x256xf32>
    %113 = arith.maximumf %111, %112 : vector<32x256xf32>
    %c0_45 = arith.constant 0 : index
    %c1_46 = arith.constant 1 : index
    %c0_47 = arith.constant 0 : index
    %c0_48 = arith.constant 0 : index
    %114 = vector.load %arg6[%c0_45, %c1_46, %c0_47, %c0_48] : memref<2x2x32x32xbf16, #tpu.memory_space<vmem>>, vector<1x1x32x32xbf16>
    %115 = vector.shape_cast %114 : vector<1x1x32x32xbf16> to vector<32x32xbf16>
    %116 = arith.truncf %113 : vector<32x256xf32> to vector<32x256xbf16>
    %cst_49 = arith.constant dense<0.000000e+00> : vector<32x256xf32>
    %117 = tpu.matmul %115, %116, %cst_49 {dimension_numbers = #tpu.dot_dimension_numbers<[1], [0], [0], [1], [0, 0, 1, 1], [], []>} : vector<32x32xbf16>, vector<32x256xbf16>, vector<32x256xf32> -> vector<32x256xf32>
    %118 = arith.addf %33, %117 : vector<32x256xf32>
    %c1_50 = arith.constant 1 : index
    %c0_51 = arith.constant 0 : index
    %c0_52 = arith.constant 0 : index
    %c0_53 = arith.constant 0 : index
    %119 = vector.load %arg4[%c1_50, %c0_51, %c0_52, %c0_53] : memref<2x2x64x8xf32, #tpu.memory_space<vmem>>, vector<1x1x64x8xf32>
    %120 = vector.shape_cast %119 : vector<1x1x64x8xf32> to vector<64x8xf32>
    %c1_54 = arith.constant 1 : index
    %c0_55 = arith.constant 0 : index
    %c0_56 = arith.constant 0 : index
    %c0_57 = arith.constant 0 : index
    %121 = vector.load %arg5[%c1_54, %c0_55, %c0_56, %c0_57] : memref<2x2x64x1xf32, #tpu.memory_space<vmem>>, vector<1x1x64x1xf32>
    %122 = vector.shape_cast %121 : vector<1x1x64x1xf32> to vector<64x1xf32>
    %cst_58 = arith.constant dense<0.000000e+00> : vector<32xf32>
    %123 = vector.multi_reduction <add>, %118, %cst_58 [1] : vector<32x256xf32> to vector<32xf32>
    %124 = vector.shape_cast %123 : vector<32xf32> to vector<32x1xf32>
    %125 = arith.mulf %118, %118 : vector<32x256xf32>
    %cst_59 = arith.constant dense<0.000000e+00> : vector<32xf32>
    %126 = vector.multi_reduction <add>, %125, %cst_59 [1] : vector<32x256xf32> to vector<32xf32>
    %127 = vector.shape_cast %126 : vector<32xf32> to vector<32x1xf32>
    %cst_60 = arith.constant 3.906250e-03 : f32
    %128 = vector.broadcast %cst_60 : f32 to vector<32x1xf32>
    %129 = arith.mulf %124, %128 : vector<32x1xf32>
    %cst_61 = arith.constant 3.906250e-03 : f32
    %130 = vector.broadcast %cst_61 : f32 to vector<32x1xf32>
    %131 = arith.mulf %127, %130 : vector<32x1xf32>
    %132 = arith.mulf %129, %129 : vector<32x1xf32>
    %133 = arith.subf %131, %132 : vector<32x1xf32>
    %cst_62 = arith.constant 0.000000e+00 : f32
    %134 = vector.broadcast %cst_62 : f32 to vector<32x1xf32>
    %135 = arith.maximumf %133, %134 : vector<32x1xf32>
    %cst_63 = arith.constant 9.99999974E-6 : f32
    %136 = vector.broadcast %cst_63 : f32 to vector<32x1xf32>
    %137 = arith.addf %135, %136 : vector<32x1xf32>
    %138 = math.rsqrt %137 : vector<32x1xf32>
    %cst_64 = arith.constant dense<0.000000e+00> : vector<64x2xf32>
    %139 = tpu.matmul %120, %1, %cst_64 {dimension_numbers = #tpu.dot_dimension_numbers<[1], [0], [0], [1], [0, 0, 1, 1], [], []>} : vector<64x8xf32>, vector<8x2xf32>, vector<64x2xf32> -> vector<64x2xf32>
    %140 = vector.broadcast %122 : vector<64x1xf32> to vector<64x2xf32>
    %141 = arith.addf %139, %140 : vector<64x2xf32>
    %142 = vector.extract_strided_slice %141 {offsets = [0, 0], sizes = [32, 2], strides = [1, 1]} : vector<64x2xf32> to vector<32x2xf32>
    %143 = vector.broadcast %138 : vector<32x1xf32> to vector<32x2xf32>
    %144 = arith.mulf %142, %143 : vector<32x2xf32>
    %145 = vector.extract_strided_slice %141 {offsets = [32, 0], sizes = [32, 2], strides = [1, 1]} : vector<64x2xf32> to vector<32x2xf32>
    %146 = vector.broadcast %129 : vector<32x1xf32> to vector<32x2xf32>
    %147 = arith.mulf %146, %144 : vector<32x2xf32>
    %148 = arith.subf %145, %147 : vector<32x2xf32>
    %149 = tpu.concatenate %144, %148 in 0 : vector<32x2xf32>, vector<32x2xf32> -> vector<64x2xf32>
    %cst_65 = arith.constant dense<0.000000e+00> : vector<64x256xf32>
    %150 = tpu.matmul %149, %12, %cst_65 {dimension_numbers = #tpu.dot_dimension_numbers<[1], [0], [0], [1], [0, 0, 1, 1], [], []>} : vector<64x2xf32>, vector<2x256xf32>, vector<64x256xf32> -> vector<64x256xf32>
    %151 = vector.extract_strided_slice %150 {offsets = [0, 0], sizes = [32, 256], strides = [1, 1]} : vector<64x256xf32> to vector<32x256xf32>
    %152 = arith.mulf %118, %151 : vector<32x256xf32>
    %153 = vector.extract_strided_slice %150 {offsets = [32, 0], sizes = [32, 256], strides = [1, 1]} : vector<64x256xf32> to vector<32x256xf32>
    %154 = arith.addf %152, %153 : vector<32x256xf32>
    %cst_66 = arith.constant 0.000000e+00 : f32
    %155 = vector.broadcast %cst_66 : f32 to vector<32x256xf32>
    %156 = arith.maximumf %154, %155 : vector<32x256xf32>
    %c1_67 = arith.constant 1 : index
    %c0_68 = arith.constant 0 : index
    %c0_69 = arith.constant 0 : index
    %c0_70 = arith.constant 0 : index
    %157 = vector.load %arg6[%c1_67, %c0_68, %c0_69, %c0_70] : memref<2x2x32x32xbf16, #tpu.memory_space<vmem>>, vector<1x1x32x32xbf16>
    %158 = vector.shape_cast %157 : vector<1x1x32x32xbf16> to vector<32x32xbf16>
    %159 = arith.truncf %156 : vector<32x256xf32> to vector<32x256xbf16>
    %cst_71 = arith.constant dense<0.000000e+00> : vector<32x256xf32>
    %160 = tpu.matmul %158, %159, %cst_71 {dimension_numbers = #tpu.dot_dimension_numbers<[1], [0], [0], [1], [0, 0, 1, 1], [], []>} : vector<32x32xbf16>, vector<32x256xbf16>, vector<32x256xf32> -> vector<32x256xf32>
    %c1_72 = arith.constant 1 : index
    %c1_73 = arith.constant 1 : index
    %c0_74 = arith.constant 0 : index
    %c0_75 = arith.constant 0 : index
    %161 = vector.load %arg4[%c1_72, %c1_73, %c0_74, %c0_75] : memref<2x2x64x8xf32, #tpu.memory_space<vmem>>, vector<1x1x64x8xf32>
    %162 = vector.shape_cast %161 : vector<1x1x64x8xf32> to vector<64x8xf32>
    %c1_76 = arith.constant 1 : index
    %c1_77 = arith.constant 1 : index
    %c0_78 = arith.constant 0 : index
    %c0_79 = arith.constant 0 : index
    %163 = vector.load %arg5[%c1_76, %c1_77, %c0_78, %c0_79] : memref<2x2x64x1xf32, #tpu.memory_space<vmem>>, vector<1x1x64x1xf32>
    %164 = vector.shape_cast %163 : vector<1x1x64x1xf32> to vector<64x1xf32>
    %cst_80 = arith.constant dense<0.000000e+00> : vector<32xf32>
    %165 = vector.multi_reduction <add>, %160, %cst_80 [1] : vector<32x256xf32> to vector<32xf32>
    %166 = vector.shape_cast %165 : vector<32xf32> to vector<32x1xf32>
    %167 = arith.mulf %160, %160 : vector<32x256xf32>
    %cst_81 = arith.constant dense<0.000000e+00> : vector<32xf32>
    %168 = vector.multi_reduction <add>, %167, %cst_81 [1] : vector<32x256xf32> to vector<32xf32>
    %169 = vector.shape_cast %168 : vector<32xf32> to vector<32x1xf32>
    %cst_82 = arith.constant 3.906250e-03 : f32
    %170 = vector.broadcast %cst_82 : f32 to vector<32x1xf32>
    %171 = arith.mulf %166, %170 : vector<32x1xf32>
    %cst_83 = arith.constant 3.906250e-03 : f32
    %172 = vector.broadcast %cst_83 : f32 to vector<32x1xf32>
    %173 = arith.mulf %169, %172 : vector<32x1xf32>
    %174 = arith.mulf %171, %171 : vector<32x1xf32>
    %175 = arith.subf %173, %174 : vector<32x1xf32>
    %cst_84 = arith.constant 0.000000e+00 : f32
    %176 = vector.broadcast %cst_84 : f32 to vector<32x1xf32>
    %177 = arith.maximumf %175, %176 : vector<32x1xf32>
    %cst_85 = arith.constant 9.99999974E-6 : f32
    %178 = vector.broadcast %cst_85 : f32 to vector<32x1xf32>
    %179 = arith.addf %177, %178 : vector<32x1xf32>
    %180 = math.rsqrt %179 : vector<32x1xf32>
    %cst_86 = arith.constant dense<0.000000e+00> : vector<64x2xf32>
    %181 = tpu.matmul %162, %1, %cst_86 {dimension_numbers = #tpu.dot_dimension_numbers<[1], [0], [0], [1], [0, 0, 1, 1], [], []>} : vector<64x8xf32>, vector<8x2xf32>, vector<64x2xf32> -> vector<64x2xf32>
    %182 = vector.broadcast %164 : vector<64x1xf32> to vector<64x2xf32>
    %183 = arith.addf %181, %182 : vector<64x2xf32>
    %184 = vector.extract_strided_slice %183 {offsets = [0, 0], sizes = [32, 2], strides = [1, 1]} : vector<64x2xf32> to vector<32x2xf32>
    %185 = vector.broadcast %180 : vector<32x1xf32> to vector<32x2xf32>
    %186 = arith.mulf %184, %185 : vector<32x2xf32>
    %187 = vector.extract_strided_slice %183 {offsets = [32, 0], sizes = [32, 2], strides = [1, 1]} : vector<64x2xf32> to vector<32x2xf32>
    %188 = vector.broadcast %171 : vector<32x1xf32> to vector<32x2xf32>
    %189 = arith.mulf %188, %186 : vector<32x2xf32>
    %190 = arith.subf %187, %189 : vector<32x2xf32>
    %191 = tpu.concatenate %186, %190 in 0 : vector<32x2xf32>, vector<32x2xf32> -> vector<64x2xf32>
    %cst_87 = arith.constant dense<0.000000e+00> : vector<64x256xf32>
    %192 = tpu.matmul %191, %12, %cst_87 {dimension_numbers = #tpu.dot_dimension_numbers<[1], [0], [0], [1], [0, 0, 1, 1], [], []>} : vector<64x2xf32>, vector<2x256xf32>, vector<64x256xf32> -> vector<64x256xf32>
    %193 = vector.extract_strided_slice %192 {offsets = [0, 0], sizes = [32, 256], strides = [1, 1]} : vector<64x256xf32> to vector<32x256xf32>
    %194 = arith.mulf %160, %193 : vector<32x256xf32>
    %195 = vector.extract_strided_slice %192 {offsets = [32, 0], sizes = [32, 256], strides = [1, 1]} : vector<64x256xf32> to vector<32x256xf32>
    %196 = arith.addf %194, %195 : vector<32x256xf32>
    %cst_88 = arith.constant 0.000000e+00 : f32
    %197 = vector.broadcast %cst_88 : f32 to vector<32x256xf32>
    %198 = arith.maximumf %196, %197 : vector<32x256xf32>
    %c1_89 = arith.constant 1 : index
    %c1_90 = arith.constant 1 : index
    %c0_91 = arith.constant 0 : index
    %c0_92 = arith.constant 0 : index
    %199 = vector.load %arg6[%c1_89, %c1_90, %c0_91, %c0_92] : memref<2x2x32x32xbf16, #tpu.memory_space<vmem>>, vector<1x1x32x32xbf16>
    %200 = vector.shape_cast %199 : vector<1x1x32x32xbf16> to vector<32x32xbf16>
    %201 = arith.truncf %198 : vector<32x256xf32> to vector<32x256xbf16>
    %cst_93 = arith.constant dense<0.000000e+00> : vector<32x256xf32>
    %202 = tpu.matmul %200, %201, %cst_93 {dimension_numbers = #tpu.dot_dimension_numbers<[1], [0], [0], [1], [0, 0, 1, 1], [], []>} : vector<32x32xbf16>, vector<32x256xbf16>, vector<32x256xf32> -> vector<32x256xf32>
    %203 = arith.addf %118, %202 : vector<32x256xf32>
    %c0_94 = arith.constant 0 : index
    %c0_95 = arith.constant 0 : index
    %204 = vector.load %arg7[%c0_94, %c0_95] : memref<64x8xf32, #tpu.memory_space<vmem>>, vector<64x8xf32>
    %c0_96 = arith.constant 0 : index
    %c0_97 = arith.constant 0 : index
    %205 = vector.load %arg8[%c0_96, %c0_97] : memref<64x1xf32, #tpu.memory_space<vmem>>, vector<64x1xf32>
    %cst_98 = arith.constant dense<0.000000e+00> : vector<32xf32>
    %206 = vector.multi_reduction <add>, %203, %cst_98 [1] : vector<32x256xf32> to vector<32xf32>
    %207 = vector.shape_cast %206 : vector<32xf32> to vector<32x1xf32>
    %208 = arith.mulf %203, %203 : vector<32x256xf32>
    %cst_99 = arith.constant dense<0.000000e+00> : vector<32xf32>
    %209 = vector.multi_reduction <add>, %208, %cst_99 [1] : vector<32x256xf32> to vector<32xf32>
    %210 = vector.shape_cast %209 : vector<32xf32> to vector<32x1xf32>
    %cst_100 = arith.constant 3.906250e-03 : f32
    %211 = vector.broadcast %cst_100 : f32 to vector<32x1xf32>
    %212 = arith.mulf %207, %211 : vector<32x1xf32>
    %cst_101 = arith.constant 3.906250e-03 : f32
    %213 = vector.broadcast %cst_101 : f32 to vector<32x1xf32>
    %214 = arith.mulf %210, %213 : vector<32x1xf32>
    %215 = arith.mulf %212, %212 : vector<32x1xf32>
    %216 = arith.subf %214, %215 : vector<32x1xf32>
    %cst_102 = arith.constant 0.000000e+00 : f32
    %217 = vector.broadcast %cst_102 : f32 to vector<32x1xf32>
    %218 = arith.maximumf %216, %217 : vector<32x1xf32>
    %cst_103 = arith.constant 9.99999974E-6 : f32
    %219 = vector.broadcast %cst_103 : f32 to vector<32x1xf32>
    %220 = arith.addf %218, %219 : vector<32x1xf32>
    %221 = math.rsqrt %220 : vector<32x1xf32>
    %cst_104 = arith.constant dense<0.000000e+00> : vector<64x2xf32>
    %222 = tpu.matmul %204, %1, %cst_104 {dimension_numbers = #tpu.dot_dimension_numbers<[1], [0], [0], [1], [0, 0, 1, 1], [], []>} : vector<64x8xf32>, vector<8x2xf32>, vector<64x2xf32> -> vector<64x2xf32>
    %223 = vector.broadcast %205 : vector<64x1xf32> to vector<64x2xf32>
    %224 = arith.addf %222, %223 : vector<64x2xf32>
    %225 = vector.extract_strided_slice %224 {offsets = [0, 0], sizes = [32, 2], strides = [1, 1]} : vector<64x2xf32> to vector<32x2xf32>
    %226 = vector.broadcast %221 : vector<32x1xf32> to vector<32x2xf32>
    %227 = arith.mulf %225, %226 : vector<32x2xf32>
    %228 = vector.extract_strided_slice %224 {offsets = [32, 0], sizes = [32, 2], strides = [1, 1]} : vector<64x2xf32> to vector<32x2xf32>
    %229 = vector.broadcast %212 : vector<32x1xf32> to vector<32x2xf32>
    %230 = arith.mulf %229, %227 : vector<32x2xf32>
    %231 = arith.subf %228, %230 : vector<32x2xf32>
    %232 = tpu.concatenate %227, %231 in 0 : vector<32x2xf32>, vector<32x2xf32> -> vector<64x2xf32>
    %cst_105 = arith.constant dense<0.000000e+00> : vector<64x256xf32>
    %233 = tpu.matmul %232, %12, %cst_105 {dimension_numbers = #tpu.dot_dimension_numbers<[1], [0], [0], [1], [0, 0, 1, 1], [], []>} : vector<64x2xf32>, vector<2x256xf32>, vector<64x256xf32> -> vector<64x256xf32>
    %234 = vector.extract_strided_slice %233 {offsets = [0, 0], sizes = [32, 256], strides = [1, 1]} : vector<64x256xf32> to vector<32x256xf32>
    %235 = arith.mulf %203, %234 : vector<32x256xf32>
    %236 = vector.extract_strided_slice %233 {offsets = [32, 0], sizes = [32, 256], strides = [1, 1]} : vector<64x256xf32> to vector<32x256xf32>
    %237 = arith.addf %235, %236 : vector<32x256xf32>
    %cst_106 = arith.constant 0.000000e+00 : f32
    %238 = vector.broadcast %cst_106 : f32 to vector<32x256xf32>
    %239 = arith.maximumf %237, %238 : vector<32x256xf32>
    %c0_107 = arith.constant 0 : index
    %c0_108 = arith.constant 0 : index
    %240 = vector.load %arg9[%c0_107, %c0_108] : memref<32x1xf32, #tpu.memory_space<vmem>>, vector<32x1xf32>
    %241 = vector.broadcast %240 : vector<32x1xf32> to vector<32x256xf32>
    %242 = arith.mulf %239, %241 : vector<32x256xf32>
    %cst_109 = arith.constant dense<0.000000e+00> : vector<256xf32>
    %243 = vector.multi_reduction <add>, %242, %cst_109 [0] : vector<32x256xf32> to vector<256xf32>
    %244 = vector.shape_cast %243 : vector<256xf32> to vector<1x256xf32>
    %c0_110 = arith.constant 0 : index
    %c0_111 = arith.constant 0 : index
    %245 = vector.load %arg10[%c0_110, %c0_111] : memref<1x1xf32, #tpu.memory_space<vmem>>, vector<1x1xf32>
    %246 = vector.broadcast %245 : vector<1x1xf32> to vector<1x256xf32>
    %247 = arith.addf %244, %246 : vector<1x256xf32>
    %248 = arith.negf %247 : vector<1x256xf32>
    %249 = math.exp %248 : vector<1x256xf32>
    %cst_112 = arith.constant 1.000000e+00 : f32
    %250 = vector.broadcast %cst_112 : f32 to vector<1x256xf32>
    %251 = arith.addf %250, %249 : vector<1x256xf32>
    %252 = arith.divf %250, %251 : vector<1x256xf32>
    %c0_113 = arith.constant 0 : index
    %c0_114 = arith.constant 0 : index
    %253 = vector.load %arg11[%c0_113, %c0_114] : memref<1x256xf32, #tpu.memory_space<vmem>>, vector<1x256xf32>
    tpu.vector_store %arg11[%c0_113, %c0_114], %252 {strides = array<i32>} : memref<1x256xf32, #tpu.memory_space<vmem>>, vector<1x256xf32>,
    return
  }
}

</mosaic_0001>

<llo_original>
// kernel: tpu_custom_call.1
$region0: #{tpu_custom_call.1}
  #allocation0 [shape = 'u32[]', space=smem, size = 0x4, offset = 0x4, fixed_abs, tag = 'smem constant byte address 0x4 - core index']
  #allocation1 [shape = 'u32[144,128]{1,0:T(1,128)}', space=vmem, size = 0x12000, scoped, tag = 'internal scratch']
  #allocation2 [shape = 'f32[1,1]{1,0:T(1,128)S(1)}', space=vmem, size = 0x200, scoped, tag = 'scoped memory for tpu_custom_call.1']
  %s0 = inlined_call_operand.vmem [shape: f32[3,256], index: 0, kind: input, shape index: {}]
  %s1 = inlined_call_operand.vmem [shape: f32[8,2], index: 1, kind: input, shape index: {}]
  %s2 = inlined_call_operand.vmem [shape: f32[32,3], index: 2, kind: input, shape index: {}]
  %s3 = inlined_call_operand.vmem [shape: f32[32,1], index: 3, kind: input, shape index: {}]
  %s4 = inlined_call_operand.vmem [shape: f32[2,2,64,8], index: 4, kind: input, shape index: {}]
  %s5 = inlined_call_operand.vmem [shape: f32[2,2,64,1], index: 5, kind: input, shape index: {}]
  %s6 = inlined_call_operand.vmem [shape: bf16[2,2,32,32], index: 6, kind: input, shape index: {}]
  %s7 = inlined_call_operand.vmem [shape: f32[64,8], index: 7, kind: input, shape index: {}]
  %s8 = inlined_call_operand.vmem [shape: f32[64,1], index: 8, kind: input, shape index: {}]
  %s9 = inlined_call_operand.vmem [shape: f32[32,1], index: 9, kind: input, shape index: {}]
  %s10 = inlined_call_operand.<no memory space> [shape: f32[1,1], index: 10, kind: input, shape index: {}]
  %s11 = inlined_call_operand.hbm [shape: f32[1,256], index: 11, kind: output, shape index: {}]
  %s12 = sld [smem:[#allocation0]]
  $region54: #{tpu_custom_call.1} parent=0
    _
  %s14 = ssub.s32 1, %s12
  %s15 = scalar_select 0, %s14, %s12
  %v16 = vstv %s10
  %17 = vst [vmem:[#allocation2] sm:$0x1] %v16
  $region1: #{tpu_custom_call.1} parent=0
    #allocation3 [shape = 'u8[1024]{0}', space=vmem, size = 0x400, scoped, tag = 'output window, operand 0, single buffered']
    #allocation4 [shape = 's32[1]{0}', space=sflag, size = 0x4, scoped, tag = 'scoped memory for tpu_custom_call.1']
    %18 = vsyncpa [#allocation4], 0
    // Predicated region
    $region2: #{tpu_custom_call.1} parent=1 // pred_check
      _
    $region3: #{tpu_custom_call.1} parent=1 // pred_check_branch
      %20 = sbr.rel (0) target = $region5
    $region4: #{tpu_custom_call.1} parent=1 // pred_region
      _
    $region5: #{tpu_custom_call.1} parent=1 // pred_fallthru
      _
    // Predicated region
    $region6: #{tpu_custom_call.1} parent=1 // pred_check
      _
    $region7: #{tpu_custom_call.1} parent=1 // pred_check_branch
      %22 = sbr.rel (0) target = $region9
    $region8: #{tpu_custom_call.1} parent=1 // pred_region
      _
    $region9: #{tpu_custom_call.1} parent=1 // pred_fallthru
      _
    // Predicated region
    $region10: #{tpu_custom_call.1} parent=1 // pred_check
      _
    $region11: #{tpu_custom_call.1} parent=1 // pred_check_branch
      %24 = sbr.rel (0) target = $region13
    $region12: #{tpu_custom_call.1} parent=1 // pred_region
      _
    $region13: #{tpu_custom_call.1} parent=1 // pred_fallthru
      _
    // Predicated region
    $region14: #{tpu_custom_call.1} parent=1 // pred_check
      _
    $region15: #{tpu_custom_call.1} parent=1 // pred_check_branch
      %26 = sbr.rel (0) target = $region17
    $region16: #{tpu_custom_call.1} parent=1 // pred_region
      _
    $region17: #{tpu_custom_call.1} parent=1 // pred_fallthru
      _
    // Predicated region
    $region18: #{tpu_custom_call.1} parent=1 // pred_check
      _
    $region19: #{tpu_custom_call.1} parent=1 // pred_check_branch
      %28 = sbr.rel (0) target = $region21
    $region20: #{tpu_custom_call.1} parent=1 // pred_region
      _
    $region21: #{tpu_custom_call.1} parent=1 // pred_fallthru
      _
    // Predicated region
    $region22: #{tpu_custom_call.1} parent=1 // pred_check
      _
    $region23: #{tpu_custom_call.1} parent=1 // pred_check_branch
      %30 = sbr.rel (0) target = $region25
    $region24: #{tpu_custom_call.1} parent=1 // pred_region
      _
    $region25: #{tpu_custom_call.1} parent=1 // pred_fallthru
      _
    // Predicated region
    $region26: #{tpu_custom_call.1} parent=1 // pred_check
      _
    $region27: #{tpu_custom_call.1} parent=1 // pred_check_branch
      %32 = sbr.rel (0) target = $region29
    $region28: #{tpu_custom_call.1} parent=1 // pred_region
      _
    $region29: #{tpu_custom_call.1} parent=1 // pred_fallthru
      _
    // Predicated region
    $region30: #{tpu_custom_call.1} parent=1 // pred_check
      _
    $region31: #{tpu_custom_call.1} parent=1 // pred_check_branch
      %34 = sbr.rel (0) target = $region33
    $region32: #{tpu_custom_call.1} parent=1 // pred_region
      _
    $region33: #{tpu_custom_call.1} parent=1 // pred_fallthru
      _
    // Predicated region
    $region34: #{tpu_custom_call.1} parent=1 // pred_check
      _
    $region35: #{tpu_custom_call.1} parent=1 // pred_check_branch
      %36 = sbr.rel (0) target = $region37
    $region36: #{tpu_custom_call.1} parent=1 // pred_region
      _
    $region37: #{tpu_custom_call.1} parent=1 // pred_fallthru
      _
    // Predicated region
    $region38: #{tpu_custom_call.1} parent=1 // pred_check
      _
    $region39: #{tpu_custom_call.1} parent=1 // pred_check_branch
      %38 = sbr.rel (0) target = $region41
    $region40: #{tpu_custom_call.1} parent=1 // pred_region
      _
    $region41: #{tpu_custom_call.1} parent=1 // pred_fallthru
      _
    // Predicated region
    $region42: #{tpu_custom_call.1} parent=1 // pred_check
      _
    $region43: #{tpu_custom_call.1} parent=1 // pred_check_branch
      %40 = sbr.rel (0) target = $region45
    $region44: #{tpu_custom_call.1} parent=1 // pred_region
      _
    $region45: #{tpu_custom_call.1} parent=1 // pred_fallthru
      _
    %v42 = vld [vmem:[%s0] sm:$0x77]
    %v43 = vld [vmem:[%s1] sm:$0xff]
    %v44 = vlaneseq
    %v45 = vand.u32 %v44, 127
    %v46 = vadd.s32 %v45, 128
    %v47 = vlaneseq
    %v48 = vshrl.u32 %v47, 7
    %v49 = vmul.u32 %v48, 128
    %vm50 = vcmp.ge.s32.totalorder %v45, %v49
    %vm51 = vcmp.ge.s32.totalorder %v46, %v49
    %v52 = vadd.s32 %v49, 128
    %vm53 = vcmp.lt.s32.totalorder %v45, %v52
    %vm54 = vcmp.lt.s32.totalorder %v46, %v52
    %vm55 = vmand %vm50, %vm53
    %vm56 = vmand %vm51, %vm54
    %v57 = vsel %vm55, 1, 0
    %v58 = vsel %vm56, 1, 0
    %v59 = vcvt.s32.f32 %v57
    %v60 = vcvt.s32.f32 %v58
    %v61 = vld [vmem:[%s2] sm:$0xff]
    %v62 = vld [vmem:[%s2 + $0x8] sm:$0xff]
    %v63 = vld [vmem:[%s2 + $0x10] sm:$0xff]
    %v64 = vld [vmem:[%s2 + $0x18] sm:$0xff]
    %v65 = vld [vmem:[%s3] sm:$0xff]
    %v66 = vld [vmem:[%s3 + $0x8] sm:$0xff]
    %v67 = vld [vmem:[%s3 + $0x10] sm:$0xff]
    %v68 = vld [vmem:[%s3 + $0x18] sm:$0xff]
    %70 = vset.pattern.permute.xlu0 0
    %71 = vperm.xlu0 %70, %v61
    %v72 = vpop.permute.xlu0 %71
    %75 = vset.pattern.permute.xlu0 0
    %76 = vperm.xlu0 %75, %v62
    %v77 = vpop.permute.xlu0 %76
    %80 = vset.pattern.permute.xlu0 0
    %81 = vperm.xlu0 %80, %v63
    %v82 = vpop.permute.xlu0 %81
    %85 = vset.pattern.permute.xlu0 0
    %86 = vperm.xlu0 %85, %v64
    %v87 = vpop.permute.xlu0 %86
    %v90 = vlaneseq
    %v91 = vshrl.u32 %v90, 7
    %v92 = vsub.s32 0, %v91
    %v93 = vrot.slane %v42, %v92
    %v94 = vlaneseq
    %v95 = vshrl.u32 %v94, 7
    %v96 = vsub.s32 4, %v95
    %v97 = vrot.slane %v42, %v96
    %v100 = vlaneseq
    %v101 = vshrl.u32 %v100, 7
    %v102 = vsub.s32 0, %v101
    %v103 = vrot.slane %v93, %v102
    %v104 = vlaneseq
    %v105 = vshrl.u32 %v104, 7
    %v106 = vsub.s32 0, %v105
    %v107 = vrot.slane %v97, %v106
    %v108 = vmul.f32 %v72, %v103
    %v109 = vmul.f32 %v72, %v107
    %v110 = vmul.f32 %v77, %v103
    %v111 = vmul.f32 %v77, %v107
    %v112 = vmul.f32 %v82, %v103
    %v113 = vmul.f32 %v82, %v107
    %v114 = vmul.f32 %v87, %v103
    %v115 = vmul.f32 %v87, %v107
    %117 = vset.pattern.permute.xlu0 0
    %118 = vperm.xlu0 %117, %v65
    %v119 = vpop.permute.xlu0 %118
    %122 = vset.pattern.permute.xlu0 0
    %123 = vperm.xlu0 %122, %v66
    %v124 = vpop.permute.xlu0 %123
    %127 = vset.pattern.permute.xlu0 0
    %128 = vperm.xlu0 %127, %v67
    %v129 = vpop.permute.xlu0 %128
    %132 = vset.pattern.permute.xlu0 0
    %133 = vperm.xlu0 %132, %v68
    %v134 = vpop.permute.xlu0 %133
    %v136 = vadd.f32 %v119, %v108
    %v137 = vadd.f32 %v119, %v109
    %v138 = vadd.f32 %v124, %v110
    %v139 = vadd.f32 %v124, %v111
    %v140 = vadd.f32 %v129, %v112
    %v141 = vadd.f32 %v129, %v113
    %v142 = vadd.f32 %v134, %v114
    %v143 = vadd.f32 %v134, %v115
    %144 = vset.pattern.permute.xlu0 1
    %145 = vperm.xlu0 %144, %v61
    %v146 = vpop.permute.xlu0 %145
    %148 = vset.pattern.permute.xlu0 1
    %149 = vperm.xlu0 %148, %v62
    %v150 = vpop.permute.xlu0 %149
    %152 = vset.pattern.permute.xlu0 1
    %153 = vperm.xlu0 %152, %v63
    %v154 = vpop.permute.xlu0 %153
    %156 = vset.pattern.permute.xlu0 1
    %157 = vperm.xlu0 %156, %v64
    %v158 = vpop.permute.xlu0 %157
    %v160 = vlaneseq
    %v161 = vshrl.u32 %v160, 7
    %v162 = vsub.s32 1, %v161
    %v163 = vrot.slane %v42, %v162
    %v164 = vlaneseq
    %v165 = vshrl.u32 %v164, 7
    %v166 = vsub.s32 5, %v165
    %v167 = vrot.slane %v42, %v166
    %v170 = vlaneseq
    %v171 = vshrl.u32 %v170, 7
    %v172 = vsub.s32 1, %v171
    %v173 = vrot.slane %v163, %v172
    %v174 = vlaneseq
    %v175 = vshrl.u32 %v174, 7
    %v176 = vsub.s32 1, %v175
    %v177 = vrot.slane %v167, %v176
    %v178 = vmul.f32 %v146, %v173
    %v179 = vmul.f32 %v146, %v177
    %v180 = vmul.f32 %v150, %v173
    %v181 = vmul.f32 %v150, %v177
    %v182 = vmul.f32 %v154, %v173
    %v183 = vmul.f32 %v154, %v177
    %v184 = vmul.f32 %v158, %v173
    %v185 = vmul.f32 %v158, %v177
    %v186 = vadd.f32 %v136, %v178
    %v187 = vadd.f32 %v137, %v179
    %v188 = vadd.f32 %v138, %v180
    %v189 = vadd.f32 %v139, %v181
    %v190 = vadd.f32 %v140, %v182
    %v191 = vadd.f32 %v141, %v183
    %v192 = vadd.f32 %v142, %v184
    %v193 = vadd.f32 %v143, %v185
    %194 = vset.pattern.permute.xlu0 2
    %195 = vperm.xlu0 %194, %v61
    %v196 = vpop.permute.xlu0 %195
    %198 = vset.pattern.permute.xlu0 2
    %199 = vperm.xlu0 %198, %v62
    %v200 = vpop.permute.xlu0 %199
    %202 = vset.pattern.permute.xlu0 2
    %203 = vperm.xlu0 %202, %v63
    %v204 = vpop.permute.xlu0 %203
    %206 = vset.pattern.permute.xlu0 2
    %207 = vperm.xlu0 %206, %v64
    %v208 = vpop.permute.xlu0 %207
    %v210 = vlaneseq
    %v211 = vshrl.u32 %v210, 7
    %v212 = vsub.s32 2, %v211
    %v213 = vrot.slane %v42, %v212
    %v214 = vlaneseq
    %v215 = vshrl.u32 %v214, 7
    %v216 = vsub.s32 6, %v215
    %v217 = vrot.slane %v42, %v216
    %v220 = vlaneseq
    %v221 = vshrl.u32 %v220, 7
    %v222 = vsub.s32 2, %v221
    %v223 = vrot.slane %v213, %v222
    %v224 = vlaneseq
    %v225 = vshrl.u32 %v224, 7
    %v226 = vsub.s32 2, %v225
    %v227 = vrot.slane %v217, %v226
    %v228 = vmul.f32 %v196, %v223
    %v229 = vmul.f32 %v196, %v227
    %v230 = vmul.f32 %v200, %v223
    %v231 = vmul.f32 %v200, %v227
    %v232 = vmul.f32 %v204, %v223
    %v233 = vmul.f32 %v204, %v227
    %v234 = vmul.f32 %v208, %v223
    %v235 = vmul.f32 %v208, %v227
    %v236 = vadd.f32 %v186, %v228
    %v237 = vadd.f32 %v187, %v229
    %v238 = vadd.f32 %v188, %v230
    %v239 = vadd.f32 %v189, %v231
    %v240 = vadd.f32 %v190, %v232
    %v241 = vadd.f32 %v191, %v233
    %v242 = vadd.f32 %v192, %v234
    %v243 = vadd.f32 %v193, %v235
    %v244 = vld [vmem:[%s4] sm:$0xff]
    %v245 = vld [vmem:[%s4 + $0x8] sm:$0xff]
    %v246 = vld [vmem:[%s4 + $0x10] sm:$0xff]
    %v247 = vld [vmem:[%s4 + $0x18] sm:$0xff]
    %v248 = vld [vmem:[%s4 + $0x20] sm:$0xff]
    %v249 = vld [vmem:[%s4 + $0x28] sm:$0xff]
    %v250 = vld [vmem:[%s4 + $0x30] sm:$0xff]
    %v251 = vld [vmem:[%s4 + $0x38] sm:$0xff]
    %v252 = vld [vmem:[%s5] sm:$0xff]
    %v253 = vld [vmem:[%s5 + $0x8] sm:$0xff]
    %v254 = vld [vmem:[%s5 + $0x10] sm:$0xff]
    %v255 = vld [vmem:[%s5 + $0x18] sm:$0xff]
    %v256 = vld [vmem:[%s5 + $0x20] sm:$0xff]
    %v257 = vld [vmem:[%s5 + $0x28] sm:$0xff]
    %v258 = vld [vmem:[%s5 + $0x30] sm:$0xff]
    %v259 = vld [vmem:[%s5 + $0x38] sm:$0xff]
    %v260 = vadd.f32 %v236, %v237
    %261 = vadd.xlane.f32.xlu0 %v260
    %v262 = vpop.xlane.xlu0 %261
    %v263 = vadd.f32 %v238, %v239
    %264 = vadd.xlane.f32.xlu0 %v263
    %v265 = vpop.xlane.xlu0 %264
    %v266 = vadd.f32 %v240, %v241
    %267 = vadd.xlane.f32.xlu0 %v266
    %v268 = vpop.xlane.xlu0 %267
    %v269 = vadd.f32 %v242, %v243
    %270 = vadd.xlane.f32.xlu0 %v269
    %v271 = vpop.xlane.xlu0 %270
    %v272 = vmul.f32 %v236, %v236
    %v273 = vmul.f32 %v237, %v237
    %v274 = vmul.f32 %v238, %v238
    %v275 = vmul.f32 %v239, %v239
    %v276 = vmul.f32 %v240, %v240
    %v277 = vmul.f32 %v241, %v241
    %v278 = vmul.f32 %v242, %v242
    %v279 = vmul.f32 %v243, %v243
    %v280 = vadd.f32 %v272, %v273
    %281 = vadd.xlane.f32.xlu0 %v280
    %v282 = vpop.xlane.xlu0 %281
    %v283 = vadd.f32 %v274, %v275
    %284 = vadd.xlane.f32.xlu0 %v283
    %v285 = vpop.xlane.xlu0 %284
    %v286 = vadd.f32 %v276, %v277
    %287 = vadd.xlane.f32.xlu0 %v286
    %v288 = vpop.xlane.xlu0 %287
    %v289 = vadd.f32 %v278, %v279
    %290 = vadd.xlane.f32.xlu0 %v289
    %v291 = vpop.xlane.xlu0 %290
    %v292 = vmul.f32 %v262, 0.00390625
    %v293 = vmul.f32 %v265, 0.00390625
    %v294 = vmul.f32 %v268, 0.00390625
    %v295 = vmul.f32 %v271, 0.00390625
    %v296 = vmul.f32 %v282, 0.00390625
    %v297 = vmul.f32 %v285, 0.00390625
    %v298 = vmul.f32 %v288, 0.00390625
    %v299 = vmul.f32 %v291, 0.00390625
    %v300 = vmul.f32 %v292, %v292
    %v301 = vmul.f32 %v293, %v293
    %v302 = vmul.f32 %v294, %v294
    %v303 = vmul.f32 %v295, %v295
    %v304 = vsub.f32 %v296, %v300
    %v305 = vsub.f32 %v297, %v301
    %v306 = vsub.f32 %v298, %v302
    %v307 = vsub.f32 %v299, %v303
    %v308 = vmax.f32 %v304, 0.0
    %v309 = vmax.f32 %v305, 0.0
    %v310 = vmax.f32 %v306, 0.0
    %v311 = vmax.f32 %v307, 0.0
    %v312 = vadd.f32 %v308, 1e-05
    %v313 = vadd.f32 %v309, 1e-05
    %v314 = vadd.f32 %v310, 1e-05
    %v315 = vadd.f32 %v311, 1e-05
    %v316 = vrsqrt.pop %v312
    %v317 = vrsqrt.pop %v313
    %v318 = vrsqrt.pop %v314
    %v319 = vrsqrt.pop %v315
    %321 = vset.pattern.permute.xlu0 0
    %322 = vperm.xlu0 %321, %v252
    %v323 = vpop.permute.xlu0 %322
    %326 = vset.pattern.permute.xlu0 0
    %327 = vperm.xlu0 %326, %v253
    %v328 = vpop.permute.xlu0 %327
    %331 = vset.pattern.permute.xlu0 0
    %332 = vperm.xlu0 %331, %v254
    %v333 = vpop.permute.xlu0 %332
    %336 = vset.pattern.permute.xlu0 0
    %337 = vperm.xlu0 %336, %v255
    %v338 = vpop.permute.xlu0 %337
    %341 = vset.pattern.permute.xlu0 0
    %342 = vperm.xlu0 %341, %v256
    %v343 = vpop.permute.xlu0 %342
    %346 = vset.pattern.permute.xlu0 0
    %347 = vperm.xlu0 %346, %v257
    %v348 = vpop.permute.xlu0 %347
    %351 = vset.pattern.permute.xlu0 0
    %352 = vperm.xlu0 %351, %v258
    %v353 = vpop.permute.xlu0 %352
    %356 = vset.pattern.permute.xlu0 0
    %357 = vperm.xlu0 %356, %v259
    %v358 = vpop.permute.xlu0 %357
    %vm360 = vcmask 64512
    %v362 = vsel %vm360, %v244, 0
    %v365 = vsel %vm360, %v245, 0
    %v368 = vsel %vm360, %v246, 0
    %v371 = vsel %vm360, %v247, 0
    %v374 = vsel %vm360, %v248, 0
    %v377 = vsel %vm360, %v249, 0
    %v380 = vsel %vm360, %v250, 0
    %v383 = vsel %vm360, %v251, 0
    %385 = vmatprep.subr.mxu0 0.0
    %386 = vmatpush1.msra.mxu0 0.0
    %387 = vmatprep.subr.mxu0 0.0
    %388 = vmatpush1.msra.mxu0 0.0
    %389 = vmatprep.subr.mxu0 0.0
    %390 = vmatpush1.msra.mxu0 0.0
    %391 = vmatprep.subr.mxu0 0.0
    %392 = vmatpush1.msra.mxu0 0.0
    %393 = vmatprep.subr.mxu0 0.0
    %394 = vmatpush1.msra.mxu0 0.0
    %395 = vmatprep.subr.mxu0 0.0
    %396 = vmatpush1.msra.mxu0 0.0
    %397 = vmatprep.subr.mxu0 0.0
    %398 = vmatpush1.msra.mxu0 0.0
    %399 = vmatprep.subr.mxu0 0.0
    %400 = vmatpush1.msra.mxu0 0.0
    %401 = vmatprep.subr.mxu0 0.0
    %402 = vmatpush1.msra.mxu0 0.0
    %403 = vmatprep.subr.mxu0 0.0
    %404 = vmatpush1.msra.mxu0 0.0
    %405 = vmatprep.subr.mxu0 0.0
    %406 = vmatpush1.msra.mxu0 0.0
    %407 = vmatprep.subr.mxu0 0.0
    %408 = vmatpush1.msra.mxu0 0.0
    %409 = vmatprep.subr.mxu0 0.0
    %410 = vmatpush1.msra.mxu0 0.0
    %411 = vmatprep.subr.mxu0 0.0
    %412 = vmatpush1.msra.mxu0 0.0
    %413 = vmatprep.subr.mxu0 0.0
    %414 = vmatpush1.msra.mxu0 0.0
    %415 = vmatprep.subr.mxu0 0.0
    %416 = vmatpush1.msra.mxu0 %v43
    %417 = vmatprep.subr.mxu0 0.0
    %418 = vmatpush2.msra.mxu0 0.0
    %419 = vmatprep.subr.mxu0 0.0
    %420 = vmatpush2.msra.mxu0 0.0
    %421 = vmatprep.subr.mxu0 0.0
    %422 = vmatpush2.msra.mxu0 0.0
    %423 = vmatprep.subr.mxu0 0.0
    %424 = vmatpush2.msra.mxu0 0.0
    %425 = vmatprep.subr.mxu0 0.0
    %426 = vmatpush2.msra.mxu0 0.0
    %427 = vmatprep.subr.mxu0 0.0
    %428 = vmatpush2.msra.mxu0 0.0
    %429 = vmatprep.subr.mxu0 0.0
    %430 = vmatpush2.msra.mxu0 0.0
    %431 = vmatprep.subr.mxu0 0.0
    %432 = vmatpush2.msra.mxu0 0.0
    %433 = vmatprep.subr.mxu0 0.0
    %434 = vmatpush2.msra.mxu0 0.0
    %435 = vmatprep.subr.mxu0 0.0
    %436 = vmatpush2.msra.mxu0 0.0
    %437 = vmatprep.subr.mxu0 0.0
    %438 = vmatpush2.msra.mxu0 0.0
    %439 = vmatprep.subr.mxu0 0.0
    %440 = vmatpush2.msra.mxu0 0.0
    %441 = vmatprep.subr.mxu0 0.0
    %442 = vmatpush2.msra.mxu0 0.0
    %443 = vmatprep.subr.mxu0 0.0
    %444 = vmatpush2.msra.mxu0 0.0
    %445 = vmatprep.subr.mxu0 0.0
    %446 = vmatpush2.msra.mxu0 0.0
    %447 = vmatprep.subr.mxu0 0.0
    %448 = vmatpush2.msra.mxu0 0.0
    %449 = vmatprep.mubr.f32.mxu0 0.0
    %450 = vmatmul.mubr.f32.gmra.mxu0 %v362
    %v451 = vpop.f32.mrf.mxu0
    %v452 = vadd.f32 %v323, %v451
    %v453 = vpop.f32.mrf.mxu0
    %454 = vmatprep.mubr.f32.mxu0 0.0
    %455 = vmatmul.mubr.f32.gmra.mxu0 %v365
    %v456 = vpop.f32.mrf.mxu0
    %v457 = vadd.f32 %v328, %v456
    %v458 = vpop.f32.mrf.mxu0
    %459 = vmatprep.mubr.f32.mxu0 0.0
    %460 = vmatmul.mubr.f32.gmra.mxu0 %v368
    %v461 = vpop.f32.mrf.mxu0
    %v462 = vadd.f32 %v333, %v461
    %v463 = vpop.f32.mrf.mxu0
    %464 = vmatprep.mubr.f32.mxu0 0.0
    %465 = vmatmul.mubr.f32.gmra.mxu0 %v371
    %v466 = vpop.f32.mrf.mxu0
    %v467 = vadd.f32 %v338, %v466
    %v468 = vpop.f32.mrf.mxu0
    %469 = vmatprep.mubr.f32.mxu0 0.0
    %470 = vmatmul.mubr.f32.gmra.mxu0 %v374
    %v471 = vpop.f32.mrf.mxu0
    %v472 = vadd.f32 %v343, %v471
    %v473 = vpop.f32.mrf.mxu0
    %474 = vmatprep.mubr.f32.mxu0 0.0
    %475 = vmatmul.mubr.f32.gmra.mxu0 %v377
    %v476 = vpop.f32.mrf.mxu0
    %v477 = vadd.f32 %v348, %v476
    %v478 = vpop.f32.mrf.mxu0
    %479 = vmatprep.mubr.f32.mxu0 0.0
    %480 = vmatmul.mubr.f32.gmra.mxu0 %v380
    %v481 = vpop.f32.mrf.mxu0
    %v482 = vadd.f32 %v353, %v481
    %v483 = vpop.f32.mrf.mxu0
    %484 = vmatprep.mubr.f32.mxu0 0.0
    %485 = vmatmul.mubr.f32.gmra.mxu0 %v383
    %v486 = vpop.f32.mrf.mxu0
    %v487 = vadd.f32 %v358, %v486
    %v488 = vpop.f32.mrf.mxu0
    %489 = vdwg.mxu0
    %v490 = vmul.f32 %v452, %v316
    %v491 = vmul.f32 %v457, %v317
    %v492 = vmul.f32 %v462, %v318
    %v493 = vmul.f32 %v467, %v319
    %v494 = vmul.f32 %v292, %v490
    %v495 = vmul.f32 %v293, %v491
    %v496 = vmul.f32 %v294, %v492
    %v497 = vmul.f32 %v295, %v493
    %v498 = vsub.f32 %v472, %v494
    %v499 = vsub.f32 %v477, %v495
    %v500 = vsub.f32 %v482, %v496
    %v501 = vsub.f32 %v487, %v497
    %vm502 = vcmask 15360
    %v504 = vsel %vm502, %v490, 0
    %v507 = vsel %vm502, %v491, 0
    %v510 = vsel %vm502, %v492, 0
    %v513 = vsel %vm502, %v493, 0
    %v516 = vsel %vm502, %v498, 0
    %v519 = vsel %vm502, %v499, 0
    %v522 = vsel %vm502, %v500, 0
    %v525 = vsel %vm502, %v501, 0
    %vm527 = vcmask 1041408
    %v529 = vsel %vm527, %v59, 0
    %v532 = vsel %vm527, %v60, 0
    %534 = vmatprep.subr.mxu0 0.0
    %535 = vmatpush1.msra.mxu0 0.0
    %536 = vmatprep.subr.mxu0 0.0
    %537 = vmatpush1.msra.mxu0 0.0
    %538 = vmatprep.subr.mxu0 0.0
    %539 = vmatpush1.msra.mxu0 0.0
    %540 = vmatprep.subr.mxu0 0.0
    %541 = vmatpush1.msra.mxu0 0.0
    %542 = vmatprep.subr.mxu0 0.0
    %543 = vmatpush1.msra.mxu0 0.0
    %544 = vmatprep.subr.mxu0 0.0
    %545 = vmatpush1.msra.mxu0 0.0
    %546 = vmatprep.subr.mxu0 0.0
    %547 = vmatpush1.msra.mxu0 0.0
    %548 = vmatprep.subr.mxu0 0.0
    %549 = vmatpush1.msra.mxu0 0.0
    %550 = vmatprep.subr.mxu0 0.0
    %551 = vmatpush1.msra.mxu0 0.0
    %552 = vmatprep.subr.mxu0 0.0
    %553 = vmatpush1.msra.mxu0 0.0
    %554 = vmatprep.subr.mxu0 0.0
    %555 = vmatpush1.msra.mxu0 0.0
    %556 = vmatprep.subr.mxu0 0.0
    %557 = vmatpush1.msra.mxu0 0.0
    %558 = vmatprep.subr.mxu0 0.0
    %559 = vmatpush1.msra.mxu0 0.0
    %560 = vmatprep.subr.mxu0 0.0
    %561 = vmatpush1.msra.mxu0 0.0
    %562 = vmatprep.subr.mxu0 0.0
    %563 = vmatpush1.msra.mxu0 0.0
    %564 = vmatprep.subr.mxu0 %v532
    %565 = vmatpush1.msra.mxu0 %v529
    %566 = vmatprep.subr.mxu0 0.0
    %567 = vmatpush2.msra.mxu0 0.0
    %568 = vmatprep.subr.mxu0 0.0
    %569 = vmatpush2.msra.mxu0 0.0
    %570 = vmatprep.subr.mxu0 0.0
    %571 = vmatpush2.msra.mxu0 0.0
    %572 = vmatprep.subr.mxu0 0.0
    %573 = vmatpush2.msra.mxu0 0.0
    %574 = vmatprep.subr.mxu0 0.0
    %575 = vmatpush2.msra.mxu0 0.0
    %576 = vmatprep.subr.mxu0 0.0
    %577 = vmatpush2.msra.mxu0 0.0
    %578 = vmatprep.subr.mxu0 0.0
    %579 = vmatpush2.msra.mxu0 0.0
    %580 = vmatprep.subr.mxu0 0.0
    %581 = vmatpush2.msra.mxu0 0.0
    %582 = vmatprep.subr.mxu0 0.0
    %583 = vmatpush2.msra.mxu0 0.0
    %584 = vmatprep.subr.mxu0 0.0
    %585 = vmatpush2.msra.mxu0 0.0
    %586 = vmatprep.subr.mxu0 0.0
    %587 = vmatpush2.msra.mxu0 0.0
    %588 = vmatprep.subr.mxu0 0.0
    %589 = vmatpush2.msra.mxu0 0.0
    %590 = vmatprep.subr.mxu0 0.0
    %591 = vmatpush2.msra.mxu0 0.0
    %592 = vmatprep.subr.mxu0 0.0
    %593 = vmatpush2.msra.mxu0 0.0
    %594 = vmatprep.subr.mxu0 0.0
    %595 = vmatpush2.msra.mxu0 0.0
    %596 = vmatprep.subr.mxu0 0.0
    %597 = vmatpush2.msra.mxu0 0.0
    %598 = vmatprep.mubr.f32.mxu0 0.0
    %599 = vmatmul.mubr.f32.gmra.mxu0 %v504
    %v600 = vpop.f32.mrf.mxu0
    %v601 = vadd.f32 0.0, %v600
    %v602 = vpop.f32.mrf.mxu0
    %v603 = vadd.f32 0.0, %v602
    %604 = vmatprep.mubr.f32.mxu0 0.0
    %605 = vmatmul.mubr.f32.gmra.mxu0 %v507
    %v606 = vpop.f32.mrf.mxu0
    %v607 = vadd.f32 0.0, %v606
    %v608 = vpop.f32.mrf.mxu0
    %v609 = vadd.f32 0.0, %v608
    %610 = vmatprep.mubr.f32.mxu0 0.0
    %611 = vmatmul.mubr.f32.gmra.mxu0 %v510
    %v612 = vpop.f32.mrf.mxu0
    %v613 = vadd.f32 0.0, %v612
    %v614 = vpop.f32.mrf.mxu0
    %v615 = vadd.f32 0.0, %v614
    %616 = vmatprep.mubr.f32.mxu0 0.0
    %617 = vmatmul.mubr.f32.gmra.mxu0 %v513
    %v618 = vpop.f32.mrf.mxu0
    %v619 = vadd.f32 0.0, %v618
    %v620 = vpop.f32.mrf.mxu0
    %v621 = vadd.f32 0.0, %v620
    %622 = vmatprep.mubr.f32.mxu0 0.0
    %623 = vmatmul.mubr.f32.gmra.mxu0 %v516
    %v624 = vpop.f32.mrf.mxu0
    %v625 = vadd.f32 0.0, %v624
    %v626 = vpop.f32.mrf.mxu0
    %v627 = vadd.f32 0.0, %v626
    %628 = vmatprep.mubr.f32.mxu0 0.0
    %629 = vmatmul.mubr.f32.gmra.mxu0 %v519
    %v630 = vpop.f32.mrf.mxu0
    %v631 = vadd.f32 0.0, %v630
    %v632 = vpop.f32.mrf.mxu0
    %v633 = vadd.f32 0.0, %v632
    %634 = vmatprep.mubr.f32.mxu0 0.0
    %635 = vmatmul.mubr.f32.gmra.mxu0 %v522
    %v636 = vpop.f32.mrf.mxu0
    %v637 = vadd.f32 0.0, %v636
    %v638 = vpop.f32.mrf.mxu0
    %v639 = vadd.f32 0.0, %v638
    %640 = vmatprep.mubr.f32.mxu0 0.0
    %641 = vmatmul.mubr.f32.gmra.mxu0 %v525
    %v642 = vpop.f32.mrf.mxu0
    %v643 = vadd.f32 0.0, %v642
    %v644 = vpop.f32.mrf.mxu0
    %v645 = vadd.f32 0.0, %v644
    %646 = vdwg.mxu0
    %v647 = vmul.f32 %v236, %v601
    %v648 = vmul.f32 %v237, %v603
    %v649 = vmul.f32 %v238, %v607
    %v650 = vmul.f32 %v239, %v609
    %v651 = vmul.f32 %v240, %v613
    %v652 = vmul.f32 %v241, %v615
    %v653 = vmul.f32 %v242, %v619
    %v654 = vmul.f32 %v243, %v621
    %v655 = vadd.f32 %v647, %v625
    %v656 = vadd.f32 %v648, %v627
    %v657 = vadd.f32 %v649, %v631
    %v658 = vadd.f32 %v650, %v633
    %v659 = vadd.f32 %v651, %v637
    %v660 = vadd.f32 %v652, %v639
    %v661 = vadd.f32 %v653, %v643
    %v662 = vadd.f32 %v654, %v645
    %v663 = vmax.f32 %v655, 0.0
    %v664 = vmax.f32 %v656, 0.0
    %v665 = vmax.f32 %v657, 0.0
    %v666 = vmax.f32 %v658, 0.0
    %v667 = vmax.f32 %v659, 0.0
    %v668 = vmax.f32 %v660, 0.0
    %v669 = vmax.f32 %v661, 0.0
    %v670 = vmax.f32 %v662, 0.0
    %v671 = vld [vmem:[%s6] sm:$0xf]
    %v672 = vld [vmem:[%s6 + $0x4] sm:$0xf]
    %v673 = vld [vmem:[%s6 + $0x8] sm:$0xf]
    %v674 = vld [vmem:[%s6 + $0xc] sm:$0xf]
    %v675 = vpack.c.bf16 %v665, %v663
    %v676 = vpack.c.bf16 %v666, %v664
    %v677 = vpack.c.bf16 %v669, %v667
    %v678 = vpack.c.bf16 %v670, %v668
    %v683 = vunpack.c.l.b16 %v671
    %v684 = vunpack.c.l.b16 %v672
    %v685 = vunpack.c.l.b16 %v673
    %v686 = vunpack.c.l.b16 %v674
    %v687 = vpack.c.b16 %v684, %v683
    %v688 = vpack.c.b16 %v686, %v685
    %vm689 = vcmask 261120
    %v691 = vsel %vm689, %v687, 0
    %v694 = vsel %vm689, %v688, 0
    %696 = vmatprep.subr.bf16.mxu0 0
    %697 = vmatpush1.bf16.msra.mxu0 0
    %698 = vmatprep.subr.bf16.mxu0 0
    %699 = vmatpush1.bf16.msra.mxu0 0
    %700 = vmatprep.subr.bf16.mxu0 0
    %701 = vmatpush1.bf16.msra.mxu0 0
    %702 = vmatprep.subr.bf16.mxu0 0
    %703 = vmatpush1.bf16.msra.mxu0 0
    %704 = vmatprep.subr.bf16.mxu0 0
    %705 = vmatpush1.bf16.msra.mxu0 0
    %706 = vmatprep.subr.bf16.mxu0 0
    %707 = vmatpush1.bf16.msra.mxu0 0
    %708 = vmatprep.subr.bf16.mxu0 %v678
    %709 = vmatpush1.bf16.msra.mxu0 %v677
    %710 = vmatprep.subr.bf16.mxu0 %v676
    %711 = vmatpush1.bf16.msra.mxu0 %v675
    %712 = vmatprep.subr.bf16.mxu0 0
    %713 = vmatpush2.bf16.msra.mxu0 0
    %714 = vmatprep.subr.bf16.mxu0 0
    %715 = vmatpush2.bf16.msra.mxu0 0
    %716 = vmatprep.subr.bf16.mxu0 0
    %717 = vmatpush2.bf16.msra.mxu0 0
    %718 = vmatprep.subr.bf16.mxu0 0
    %719 = vmatpush2.bf16.msra.mxu0 0
    %720 = vmatprep.subr.bf16.mxu0 0
    %721 = vmatpush2.bf16.msra.mxu0 0
    %722 = vmatprep.subr.bf16.mxu0 0
    %723 = vmatpush2.bf16.msra.mxu0 0
    %724 = vmatprep.subr.bf16.mxu0 0
    %725 = vmatpush2.bf16.msra.mxu0 0
    %726 = vmatprep.subr.bf16.mxu0 0
    %727 = vmatpush2.bf16.msra.mxu0 0
    %728 = vmatprep.mubr.bf16.mxu0 0
    %729 = vmatmul.mubr.bf16.gmra.mxu0 %v691
    %v730 = vpop.f32.mrf.mxu0
    %v731 = vadd.f32 0.0, %v730
    %v732 = vpop.f32.mrf.mxu0
    %v733 = vadd.f32 0.0, %v732
    %v734 = vpop.f32.mrf.mxu0
    %v735 = vadd.f32 0.0, %v734
    %v736 = vpop.f32.mrf.mxu0
    %v737 = vadd.f32 0.0, %v736
    %738 = vmatprep.mubr.bf16.mxu0 0
    %739 = vmatmul.mubr.bf16.gmra.mxu0 %v694
    %v740 = vpop.f32.mrf.mxu0
    %v741 = vadd.f32 0.0, %v740
    %v742 = vpop.f32.mrf.mxu0
    %v743 = vadd.f32 0.0, %v742
    %v744 = vpop.f32.mrf.mxu0
    %v745 = vadd.f32 0.0, %v744
    %v746 = vpop.f32.mrf.mxu0
    %v747 = vadd.f32 0.0, %v746
    %748 = vdwg.mxu0
    %s749 = scalar_lea.vmem %s4, 64
    %v750 = vld [vmem:[%s749] sm:$0xff]
    %v751 = vld [vmem:[%s749 + $0x8] sm:$0xff]
    %v752 = vld [vmem:[%s749 + $0x10] sm:$0xff]
    %v753 = vld [vmem:[%s749 + $0x18] sm:$0xff]
    %v754 = vld [vmem:[%s749 + $0x20] sm:$0xff]
    %v755 = vld [vmem:[%s749 + $0x28] sm:$0xff]
    %v756 = vld [vmem:[%s749 + $0x30] sm:$0xff]
    %v757 = vld [vmem:[%s749 + $0x38] sm:$0xff]
    %s758 = scalar_lea.vmem %s5, 64
    %v759 = vld [vmem:[%s758] sm:$0xff]
    %v760 = vld [vmem:[%s758 + $0x8] sm:$0xff]
    %v761 = vld [vmem:[%s758 + $0x10] sm:$0xff]
    %v762 = vld [vmem:[%s758 + $0x18] sm:$0xff]
    %v763 = vld [vmem:[%s758 + $0x20] sm:$0xff]
    %v764 = vld [vmem:[%s758 + $0x28] sm:$0xff]
    %v765 = vld [vmem:[%s758 + $0x30] sm:$0xff]
    %v766 = vld [vmem:[%s758 + $0x38] sm:$0xff]
    %v767 = vadd.f32 %v731, %v733
    %768 = vadd.xlane.f32.xlu0 %v767
    %v769 = vpop.xlane.xlu0 %768
    %v770 = vadd.f32 %v735, %v737
    %771 = vadd.xlane.f32.xlu0 %v770
    %v772 = vpop.xlane.xlu0 %771
    %v773 = vadd.f32 %v741, %v743
    %774 = vadd.xlane.f32.xlu0 %v773
    %v775 = vpop.xlane.xlu0 %774
    %v776 = vadd.f32 %v745, %v747
    %777 = vadd.xlane.f32.xlu0 %v776
    %v778 = vpop.xlane.xlu0 %777
    %v779 = vmul.f32 %v731, %v731
    %v780 = vmul.f32 %v733, %v733
    %v781 = vmul.f32 %v735, %v735
    %v782 = vmul.f32 %v737, %v737
    %v783 = vmul.f32 %v741, %v741
    %v784 = vmul.f32 %v743, %v743
    %v785 = vmul.f32 %v745, %v745
    %v786 = vmul.f32 %v747, %v747
    %v787 = vadd.f32 %v779, %v780
    %788 = vadd.xlane.f32.xlu0 %v787
    %v789 = vpop.xlane.xlu0 %788
    %v790 = vadd.f32 %v781, %v782
    %791 = vadd.xlane.f32.xlu0 %v790
    %v792 = vpop.xlane.xlu0 %791
    %v793 = vadd.f32 %v783, %v784
    %794 = vadd.xlane.f32.xlu0 %v793
    %v795 = vpop.xlane.xlu0 %794
    %v796 = vadd.f32 %v785, %v786
    %797 = vadd.xlane.f32.xlu0 %v796
    %v798 = vpop.xlane.xlu0 %797
    %v799 = vmul.f32 %v769, 0.00390625
    %v800 = vmul.f32 %v772, 0.00390625
    %v801 = vmul.f32 %v775, 0.00390625
    %v802 = vmul.f32 %v778, 0.00390625
    %v803 = vmul.f32 %v789, 0.00390625
    %v804 = vmul.f32 %v792, 0.00390625
    %v805 = vmul.f32 %v795, 0.00390625
    %v806 = vmul.f32 %v798, 0.00390625
    %v807 = vmul.f32 %v799, %v799
    %v808 = vmul.f32 %v800, %v800
    %v809 = vmul.f32 %v801, %v801
    %v810 = vmul.f32 %v802, %v802
    %v811 = vsub.f32 %v803, %v807
    %v812 = vsub.f32 %v804, %v808
    %v813 = vsub.f32 %v805, %v809
    %v814 = vsub.f32 %v806, %v810
    %v815 = vmax.f32 %v811, 0.0
    %v816 = vmax.f32 %v812, 0.0
    %v817 = vmax.f32 %v813, 0.0
    %v818 = vmax.f32 %v814, 0.0
    %v819 = vadd.f32 %v815, 1e-05
    %v820 = vadd.f32 %v816, 1e-05
    %v821 = vadd.f32 %v817, 1e-05
    %v822 = vadd.f32 %v818, 1e-05
    %v823 = vrsqrt.pop %v819
    %v824 = vrsqrt.pop %v820
    %v825 = vrsqrt.pop %v821
    %v826 = vrsqrt.pop %v822
    %828 = vset.pattern.permute.xlu0 0
    %829 = vperm.xlu0 %828, %v759
    %v830 = vpop.permute.xlu0 %829
    %833 = vset.pattern.permute.xlu0 0
    %834 = vperm.xlu0 %833, %v760
    %v835 = vpop.permute.xlu0 %834
    %838 = vset.pattern.permute.xlu0 0
    %839 = vperm.xlu0 %838, %v761
    %v840 = vpop.permute.xlu0 %839
    %843 = vset.pattern.permute.xlu0 0
    %844 = vperm.xlu0 %843, %v762
    %v845 = vpop.permute.xlu0 %844
    %848 = vset.pattern.permute.xlu0 0
    %849 = vperm.xlu0 %848, %v763
    %v850 = vpop.permute.xlu0 %849
    %853 = vset.pattern.permute.xlu0 0
    %854 = vperm.xlu0 %853, %v764
    %v855 = vpop.permute.xlu0 %854
    %858 = vset.pattern.permute.xlu0 0
    %859 = vperm.xlu0 %858, %v765
    %v860 = vpop.permute.xlu0 %859
    %863 = vset.pattern.permute.xlu0 0
    %864 = vperm.xlu0 %863, %v766
    %v865 = vpop.permute.xlu0 %864
    %v868 = vsel %vm360, %v750, 0
    %v871 = vsel %vm360, %v751, 0
    %v874 = vsel %vm360, %v752, 0
    %v877 = vsel %vm360, %v753, 0
    %v880 = vsel %vm360, %v754, 0
    %v883 = vsel %vm360, %v755, 0
    %v886 = vsel %vm360, %v756, 0
    %v889 = vsel %vm360, %v757, 0
    %891 = vmatprep.subr.mxu0 0.0
    %892 = vmatpush1.msra.mxu0 0.0
    %893 = vmatprep.subr.mxu0 0.0
    %894 = vmatpush1.msra.mxu0 0.0
    %895 = vmatprep.subr.mxu0 0.0
    %896 = vmatpush1.msra.mxu0 0.0
    %897 = vmatprep.subr.mxu0 0.0
    %898 = vmatpush1.msra.mxu0 0.0
    %899 = vmatprep.subr.mxu0 0.0
    %900 = vmatpush1.msra.mxu0 0.0
    %901 = vmatprep.subr.mxu0 0.0
    %902 = vmatpush1.msra.mxu0 0.0
    %903 = vmatprep.subr.mxu0 0.0
    %904 = vmatpush1.msra.mxu0 0.0
    %905 = vmatprep.subr.mxu0 0.0
    %906 = vmatpush1.msra.mxu0 0.0
    %907 = vmatprep.subr.mxu0 0.0
    %908 = vmatpush1.msra.mxu0 0.0
    %909 = vmatprep.subr.mxu0 0.0
    %910 = vmatpush1.msra.mxu0 0.0
    %911 = vmatprep.subr.mxu0 0.0
    %912 = vmatpush1.msra.mxu0 0.0
    %913 = vmatprep.subr.mxu0 0.0
    %914 = vmatpush1.msra.mxu0 0.0
    %915 = vmatprep.subr.mxu0 0.0
    %916 = vmatpush1.msra.mxu0 0.0
    %917 = vmatprep.subr.mxu0 0.0
    %918 = vmatpush1.msra.mxu0 0.0
    %919 = vmatprep.subr.mxu0 0.0
    %920 = vmatpush1.msra.mxu0 0.0
    %921 = vmatprep.subr.mxu0 0.0
    %922 = vmatpush1.msra.mxu0 %v43
    %923 = vmatprep.subr.mxu0 0.0
    %924 = vmatpush2.msra.mxu0 0.0
    %925 = vmatprep.subr.mxu0 0.0
    %926 = vmatpush2.msra.mxu0 0.0
    %927 = vmatprep.subr.mxu0 0.0
    %928 = vmatpush2.msra.mxu0 0.0
    %929 = vmatprep.subr.mxu0 0.0
    %930 = vmatpush2.msra.mxu0 0.0
    %931 = vmatprep.subr.mxu0 0.0
    %932 = vmatpush2.msra.mxu0 0.0
    %933 = vmatprep.subr.mxu0 0.0
    %934 = vmatpush2.msra.mxu0 0.0
    %935 = vmatprep.subr.mxu0 0.0
    %936 = vmatpush2.msra.mxu0 0.0
    %937 = vmatprep.subr.mxu0 0.0
    %938 = vmatpush2.msra.mxu0 0.0
    %939 = vmatprep.subr.mxu0 0.0
    %940 = vmatpush2.msra.mxu0 0.0
    %941 = vmatprep.subr.mxu0 0.0
    %942 = vmatpush2.msra.mxu0 0.0
    %943 = vmatprep.subr.mxu0 0.0
    %944 = vmatpush2.msra.mxu0 0.0
    %945 = vmatprep.subr.mxu0 0.0
    %946 = vmatpush2.msra.mxu0 0.0
    %947 = vmatprep.subr.mxu0 0.0
    %948 = vmatpush2.msra.mxu0 0.0
    %949 = vmatprep.subr.mxu0 0.0
    %950 = vmatpush2.msra.mxu0 0.0
    %951 = vmatprep.subr.mxu0 0.0
    %952 = vmatpush2.msra.mxu0 0.0
    %953 = vmatprep.subr.mxu0 0.0
    %954 = vmatpush2.msra.mxu0 0.0
    %955 = vmatprep.mubr.f32.mxu0 0.0
    %956 = vmatmul.mubr.f32.gmra.mxu0 %v868
    %v957 = vpop.f32.mrf.mxu0
    %v958 = vadd.f32 %v830, %v957
    %v959 = vpop.f32.mrf.mxu0
    %960 = vmatprep.mubr.f32.mxu0 0.0
    %961 = vmatmul.mubr.f32.gmra.mxu0 %v871
    %v962 = vpop.f32.mrf.mxu0
    %v963 = vadd.f32 %v835, %v962
    %v964 = vpop.f32.mrf.mxu0
    %965 = vmatprep.mubr.f32.mxu0 0.0
    %966 = vmatmul.mubr.f32.gmra.mxu0 %v874
    %v967 = vpop.f32.mrf.mxu0
    %v968 = vadd.f32 %v840, %v967
    %v969 = vpop.f32.mrf.mxu0
    %970 = vmatprep.mubr.f32.mxu0 0.0
    %971 = vmatmul.mubr.f32.gmra.mxu0 %v877
    %v972 = vpop.f32.mrf.mxu0
    %v973 = vadd.f32 %v845, %v972
    %v974 = vpop.f32.mrf.mxu0
    %975 = vmatprep.mubr.f32.mxu0 0.0
    %976 = vmatmul.mubr.f32.gmra.mxu0 %v880
    %v977 = vpop.f32.mrf.mxu0
    %v978 = vadd.f32 %v850, %v977
    %v979 = vpop.f32.mrf.mxu0
    %980 = vmatprep.mubr.f32.mxu0 0.0
    %981 = vmatmul.mubr.f32.gmra.mxu0 %v883
    %v982 = vpop.f32.mrf.mxu0
    %v983 = vadd.f32 %v855, %v982
    %v984 = vpop.f32.mrf.mxu0
    %985 = vmatprep.mubr.f32.mxu0 0.0
    %986 = vmatmul.mubr.f32.gmra.mxu0 %v886
    %v987 = vpop.f32.mrf.mxu0
    %v988 = vadd.f32 %v860, %v987
    %v989 = vpop.f32.mrf.mxu0
    %990 = vmatprep.mubr.f32.mxu0 0.0
    %991 = vmatmul.mubr.f32.gmra.mxu0 %v889
    %v992 = vpop.f32.mrf.mxu0
    %v993 = vadd.f32 %v865, %v992
    %v994 = vpop.f32.mrf.mxu0
    %995 = vdwg.mxu0
    %v996 = vmul.f32 %v958, %v823
    %v997 = vmul.f32 %v963, %v824
    %v998 = vmul.f32 %v968, %v825
    %v999 = vmul.f32 %v973, %v826
    %v1000 = vmul.f32 %v799, %v996
    %v1001 = vmul.f32 %v800, %v997
    %v1002 = vmul.f32 %v801, %v998
    %v1003 = vmul.f32 %v802, %v999
    %v1004 = vsub.f32 %v978, %v1000
    %v1005 = vsub.f32 %v983, %v1001
    %v1006 = vsub.f32 %v988, %v1002
    %v1007 = vsub.f32 %v993, %v1003
    %v1009 = vsel %vm502, %v996, 0
    %v1012 = vsel %vm502, %v997, 0
    %v1015 = vsel %vm502, %v998, 0
    %v1018 = vsel %vm502, %v999, 0
    %v1021 = vsel %vm502, %v1004, 0
    %v1024 = vsel %vm502, %v1005, 0
    %v1027 = vsel %vm502, %v1006, 0
    %v1030 = vsel %vm502, %v1007, 0
    %1032 = vmatprep.subr.mxu0 0.0
    %1033 = vmatpush1.msra.mxu0 0.0
    %1034 = vmatprep.subr.mxu0 0.0
    %1035 = vmatpush1.msra.mxu0 0.0
    %1036 = vmatprep.subr.mxu0 0.0
    %1037 = vmatpush1.msra.mxu0 0.0
    %1038 = vmatprep.subr.mxu0 0.0
    %1039 = vmatpush1.msra.mxu0 0.0
    %1040 = vmatprep.subr.mxu0 0.0
    %1041 = vmatpush1.msra.mxu0 0.0
    %1042 = vmatprep.subr.mxu0 0.0
    %1043 = vmatpush1.msra.mxu0 0.0
    %1044 = vmatprep.subr.mxu0 0.0
    %1045 = vmatpush1.msra.mxu0 0.0
    %1046 = vmatprep.subr.mxu0 0.0
    %1047 = vmatpush1.msra.mxu0 0.0
    %1048 = vmatprep.subr.mxu0 0.0
    %1049 = vmatpush1.msra.mxu0 0.0
    %1050 = vmatprep.subr.mxu0 0.0
    %1051 = vmatpush1.msra.mxu0 0.0
    %1052 = vmatprep.subr.mxu0 0.0
    %1053 = vmatpush1.msra.mxu0 0.0
    %1054 = vmatprep.subr.mxu0 0.0
    %1055 = vmatpush1.msra.mxu0 0.0
    %1056 = vmatprep.subr.mxu0 0.0
    %1057 = vmatpush1.msra.mxu0 0.0
    %1058 = vmatprep.subr.mxu0 0.0
    %1059 = vmatpush1.msra.mxu0 0.0
    %1060 = vmatprep.subr.mxu0 0.0
    %1061 = vmatpush1.msra.mxu0 0.0
    %1062 = vmatprep.subr.mxu0 %v532
    %1063 = vmatpush1.msra.mxu0 %v529
    %1064 = vmatprep.subr.mxu0 0.0
    %1065 = vmatpush2.msra.mxu0 0.0
    %1066 = vmatprep.subr.mxu0 0.0
    %1067 = vmatpush2.msra.mxu0 0.0
    %1068 = vmatprep.subr.mxu0 0.0
    %1069 = vmatpush2.msra.mxu0 0.0
    %1070 = vmatprep.subr.mxu0 0.0
    %1071 = vmatpush2.msra.mxu0 0.0
    %1072 = vmatprep.subr.mxu0 0.0
    %1073 = vmatpush2.msra.mxu0 0.0
    %1074 = vmatprep.subr.mxu0 0.0
    %1075 = vmatpush2.msra.mxu0 0.0
    %1076 = vmatprep.subr.mxu0 0.0
    %1077 = vmatpush2.msra.mxu0 0.0
    %1078 = vmatprep.subr.mxu0 0.0
    %1079 = vmatpush2.msra.mxu0 0.0
    %1080 = vmatprep.subr.mxu0 0.0
    %1081 = vmatpush2.msra.mxu0 0.0
    %1082 = vmatprep.subr.mxu0 0.0
    %1083 = vmatpush2.msra.mxu0 0.0
    %1084 = vmatprep.subr.mxu0 0.0
    %1085 = vmatpush2.msra.mxu0 0.0
    %1086 = vmatprep.subr.mxu0 0.0
    %1087 = vmatpush2.msra.mxu0 0.0
    %1088 = vmatprep.subr.mxu0 0.0
    %1089 = vmatpush2.msra.mxu0 0.0
    %1090 = vmatprep.subr.mxu0 0.0
    %1091 = vmatpush2.msra.mxu0 0.0
    %1092 = vmatprep.subr.mxu0 0.0
    %1093 = vmatpush2.msra.mxu0 0.0
    %1094 = vmatprep.subr.mxu0 0.0
    %1095 = vmatpush2.msra.mxu0 0.0
    %1096 = vmatprep.mubr.f32.mxu0 0.0
    %1097 = vmatmul.mubr.f32.gmra.mxu0 %v1009
    %v1098 = vpop.f32.mrf.mxu0
    %v1099 = vadd.f32 0.0, %v1098
    %v1100 = vpop.f32.mrf.mxu0
    %v1101 = vadd.f32 0.0, %v1100
    %1102 = vmatprep.mubr.f32.mxu0 0.0
    %1103 = vmatmul.mubr.f32.gmra.mxu0 %v1012
    %v1104 = vpop.f32.mrf.mxu0
    %v1105 = vadd.f32 0.0, %v1104
    %v1106 = vpop.f32.mrf.mxu0
    %v1107 = vadd.f32 0.0, %v1106
    %1108 = vmatprep.mubr.f32.mxu0 0.0
    %1109 = vmatmul.mubr.f32.gmra.mxu0 %v1015
    %v1110 = vpop.f32.mrf.mxu0
    %v1111 = vadd.f32 0.0, %v1110
    %v1112 = vpop.f32.mrf.mxu0
    %v1113 = vadd.f32 0.0, %v1112
    %1114 = vmatprep.mubr.f32.mxu0 0.0
    %1115 = vmatmul.mubr.f32.gmra.mxu0 %v1018
    %v1116 = vpop.f32.mrf.mxu0
    %v1117 = vadd.f32 0.0, %v1116
    %v1118 = vpop.f32.mrf.mxu0
    %v1119 = vadd.f32 0.0, %v1118
    %1120 = vmatprep.mubr.f32.mxu0 0.0
    %1121 = vmatmul.mubr.f32.gmra.mxu0 %v1021
    %v1122 = vpop.f32.mrf.mxu0
    %v1123 = vadd.f32 0.0, %v1122
    %v1124 = vpop.f32.mrf.mxu0
    %v1125 = vadd.f32 0.0, %v1124
    %1126 = vmatprep.mubr.f32.mxu0 0.0
    %1127 = vmatmul.mubr.f32.gmra.mxu0 %v1024
    %v1128 = vpop.f32.mrf.mxu0
    %v1129 = vadd.f32 0.0, %v1128
    %v1130 = vpop.f32.mrf.mxu0
    %v1131 = vadd.f32 0.0, %v1130
    %1132 = vmatprep.mubr.f32.mxu0 0.0
    %1133 = vmatmul.mubr.f32.gmra.mxu0 %v1027
    %v1134 = vpop.f32.mrf.mxu0
    %v1135 = vadd.f32 0.0, %v1134
    %v1136 = vpop.f32.mrf.mxu0
    %v1137 = vadd.f32 0.0, %v1136
    %1138 = vmatprep.mubr.f32.mxu0 0.0
    %1139 = vmatmul.mubr.f32.gmra.mxu0 %v1030
    %v1140 = vpop.f32.mrf.mxu0
    %v1141 = vadd.f32 0.0, %v1140
    %v1142 = vpop.f32.mrf.mxu0
    %v1143 = vadd.f32 0.0, %v1142
    %1144 = vdwg.mxu0
    %v1145 = vmul.f32 %v731, %v1099
    %v1146 = vmul.f32 %v733, %v1101
    %v1147 = vmul.f32 %v735, %v1105
    %v1148 = vmul.f32 %v737, %v1107
    %v1149 = vmul.f32 %v741, %v1111
    %v1150 = vmul.f32 %v743, %v1113
    %v1151 = vmul.f32 %v745, %v1117
    %v1152 = vmul.f32 %v747, %v1119
    %v1153 = vadd.f32 %v1145, %v1123
    %v1154 = vadd.f32 %v1146, %v1125
    %v1155 = vadd.f32 %v1147, %v1129
    %v1156 = vadd.f32 %v1148, %v1131
    %v1157 = vadd.f32 %v1149, %v1135
    %v1158 = vadd.f32 %v1150, %v1137
    %v1159 = vadd.f32 %v1151, %v1141
    %v1160 = vadd.f32 %v1152, %v1143
    %v1161 = vmax.f32 %v1153, 0.0
    %v1162 = vmax.f32 %v1154, 0.0
    %v1163 = vmax.f32 %v1155, 0.0
    %v1164 = vmax.f32 %v1156, 0.0
    %v1165 = vmax.f32 %v1157, 0.0
    %v1166 = vmax.f32 %v1158, 0.0
    %v1167 = vmax.f32 %v1159, 0.0
    %v1168 = vmax.f32 %v1160, 0.0
    %s1169 = scalar_lea.vmem %s6, 16
    %v1170 = vld [vmem:[%s1169] sm:$0xf]
    %v1171 = vld [vmem:[%s1169 + $0x4] sm:$0xf]
    %v1172 = vld [vmem:[%s1169 + $0x8] sm:$0xf]
    %v1173 = vld [vmem:[%s1169 + $0xc] sm:$0xf]
    %v1174 = vpack.c.bf16 %v1163, %v1161
    %v1175 = vpack.c.bf16 %v1164, %v1162
    %v1176 = vpack.c.bf16 %v1167, %v1165
    %v1177 = vpack.c.bf16 %v1168, %v1166
    %v1182 = vunpack.c.l.b16 %v1170
    %v1183 = vunpack.c.l.b16 %v1171
    %v1184 = vunpack.c.l.b16 %v1172
    %v1185 = vunpack.c.l.b16 %v1173
    %v1186 = vpack.c.b16 %v1183, %v1182
    %v1187 = vpack.c.b16 %v1185, %v1184
    %v1189 = vsel %vm689, %v1186, 0
    %v1192 = vsel %vm689, %v1187, 0
    %1194 = vmatprep.subr.bf16.mxu0 0
    %1195 = vmatpush1.bf16.msra.mxu0 0
    %1196 = vmatprep.subr.bf16.mxu0 0
    %1197 = vmatpush1.bf16.msra.mxu0 0
    %1198 = vmatprep.subr.bf16.mxu0 0
    %1199 = vmatpush1.bf16.msra.mxu0 0
    %1200 = vmatprep.subr.bf16.mxu0 0
    %1201 = vmatpush1.bf16.msra.mxu0 0
    %1202 = vmatprep.subr.bf16.mxu0 0
    %1203 = vmatpush1.bf16.msra.mxu0 0
    %1204 = vmatprep.subr.bf16.mxu0 0
    %1205 = vmatpush1.bf16.msra.mxu0 0
    %1206 = vmatprep.subr.bf16.mxu0 %v1177
    %1207 = vmatpush1.bf16.msra.mxu0 %v1176
    %1208 = vmatprep.subr.bf16.mxu0 %v1175
    %1209 = vmatpush1.bf16.msra.mxu0 %v1174
    %1210 = vmatprep.subr.bf16.mxu0 0
    %1211 = vmatpush2.bf16.msra.mxu0 0
    %1212 = vmatprep.subr.bf16.mxu0 0
    %1213 = vmatpush2.bf16.msra.mxu0 0
    %1214 = vmatprep.subr.bf16.mxu0 0
    %1215 = vmatpush2.bf16.msra.mxu0 0
    %1216 = vmatprep.subr.bf16.mxu0 0
    %1217 = vmatpush2.bf16.msra.mxu0 0
    %1218 = vmatprep.subr.bf16.mxu0 0
    %1219 = vmatpush2.bf16.msra.mxu0 0
    %1220 = vmatprep.subr.bf16.mxu0 0
    %1221 = vmatpush2.bf16.msra.mxu0 0
    %1222 = vmatprep.subr.bf16.mxu0 0
    %1223 = vmatpush2.bf16.msra.mxu0 0
    %1224 = vmatprep.subr.bf16.mxu0 0
    %1225 = vmatpush2.bf16.msra.mxu0 0
    %1226 = vmatprep.mubr.bf16.mxu0 0
    %1227 = vmatmul.mubr.bf16.gmra.mxu0 %v1189
    %v1228 = vpop.f32.mrf.mxu0
    %v1229 = vadd.f32 0.0, %v1228
    %v1230 = vpop.f32.mrf.mxu0
    %v1231 = vadd.f32 0.0, %v1230
    %v1232 = vpop.f32.mrf.mxu0
    %v1233 = vadd.f32 0.0, %v1232
    %v1234 = vpop.f32.mrf.mxu0
    %v1235 = vadd.f32 0.0, %v1234
    %1236 = vmatprep.mubr.bf16.mxu0 0
    %1237 = vmatmul.mubr.bf16.gmra.mxu0 %v1192
    %v1238 = vpop.f32.mrf.mxu0
    %v1239 = vadd.f32 0.0, %v1238
    %v1240 = vpop.f32.mrf.mxu0
    %v1241 = vadd.f32 0.0, %v1240
    %v1242 = vpop.f32.mrf.mxu0
    %v1243 = vadd.f32 0.0, %v1242
    %v1244 = vpop.f32.mrf.mxu0
    %v1245 = vadd.f32 0.0, %v1244
    %1246 = vdwg.mxu0
    %v1247 = vadd.f32 %v236, %v1229
    %v1248 = vadd.f32 %v237, %v1231
    %v1249 = vadd.f32 %v238, %v1233
    %v1250 = vadd.f32 %v239, %v1235
    %v1251 = vadd.f32 %v240, %v1239
    %v1252 = vadd.f32 %v241, %v1241
    %v1253 = vadd.f32 %v242, %v1243
    %v1254 = vadd.f32 %v243, %v1245
    %s1255 = scalar_lea.vmem %s4, 128
    %v1256 = vld [vmem:[%s1255] sm:$0xff]
    %v1257 = vld [vmem:[%s1255 + $0x8] sm:$0xff]
    %v1258 = vld [vmem:[%s1255 + $0x10] sm:$0xff]
    %v1259 = vld [vmem:[%s1255 + $0x18] sm:$0xff]
    %v1260 = vld [vmem:[%s1255 + $0x20] sm:$0xff]
    %v1261 = vld [vmem:[%s1255 + $0x28] sm:$0xff]
    %v1262 = vld [vmem:[%s1255 + $0x30] sm:$0xff]
    %v1263 = vld [vmem:[%s1255 + $0x38] sm:$0xff]
    %s1264 = scalar_lea.vmem %s5, 128
    %v1265 = vld [vmem:[%s1264] sm:$0xff]
    %v1266 = vld [vmem:[%s1264 + $0x8] sm:$0xff]
    %v1267 = vld [vmem:[%s1264 + $0x10] sm:$0xff]
    %v1268 = vld [vmem:[%s1264 + $0x18] sm:$0xff]
    %v1269 = vld [vmem:[%s1264 + $0x20] sm:$0xff]
    %v1270 = vld [vmem:[%s1264 + $0x28] sm:$0xff]
    %v1271 = vld [vmem:[%s1264 + $0x30] sm:$0xff]
    %v1272 = vld [vmem:[%s1264 + $0x38] sm:$0xff]
    %v1273 = vadd.f32 %v1247, %v1248
    %1274 = vadd.xlane.f32.xlu0 %v1273
    %v1275 = vpop.xlane.xlu0 %1274
    %v1276 = vadd.f32 %v1249, %v1250
    %1277 = vadd.xlane.f32.xlu0 %v1276
    %v1278 = vpop.xlane.xlu0 %1277
    %v1279 = vadd.f32 %v1251, %v1252
    %1280 = vadd.xlane.f32.xlu0 %v1279
    %v1281 = vpop.xlane.xlu0 %1280
    %v1282 = vadd.f32 %v1253, %v1254
    %1283 = vadd.xlane.f32.xlu0 %v1282
    %v1284 = vpop.xlane.xlu0 %1283
    %v1285 = vmul.f32 %v1247, %v1247
    %v1286 = vmul.f32 %v1248, %v1248
    %v1287 = vmul.f32 %v1249, %v1249
    %v1288 = vmul.f32 %v1250, %v1250
    %v1289 = vmul.f32 %v1251, %v1251
    %v1290 = vmul.f32 %v1252, %v1252
    %v1291 = vmul.f32 %v1253, %v1253
    %v1292 = vmul.f32 %v1254, %v1254
    %v1293 = vadd.f32 %v1285, %v1286
    %1294 = vadd.xlane.f32.xlu0 %v1293
    %v1295 = vpop.xlane.xlu0 %1294
    %v1296 = vadd.f32 %v1287, %v1288
    %1297 = vadd.xlane.f32.xlu0 %v1296
    %v1298 = vpop.xlane.xlu0 %1297
    %v1299 = vadd.f32 %v1289, %v1290
    %1300 = vadd.xlane.f32.xlu0 %v1299
    %v1301 = vpop.xlane.xlu0 %1300
    %v1302 = vadd.f32 %v1291, %v1292
    %1303 = vadd.xlane.f32.xlu0 %v1302
    %v1304 = vpop.xlane.xlu0 %1303
    %v1305 = vmul.f32 %v1275, 0.00390625
    %v1306 = vmul.f32 %v1278, 0.00390625
    %v1307 = vmul.f32 %v1281, 0.00390625
    %v1308 = vmul.f32 %v1284, 0.00390625
    %v1309 = vmul.f32 %v1295, 0.00390625
    %v1310 = vmul.f32 %v1298, 0.00390625
    %v1311 = vmul.f32 %v1301, 0.00390625
    %v1312 = vmul.f32 %v1304, 0.00390625
    %v1313 = vmul.f32 %v1305, %v1305
    %v1314 = vmul.f32 %v1306, %v1306
    %v1315 = vmul.f32 %v1307, %v1307
    %v1316 = vmul.f32 %v1308, %v1308
    %v1317 = vsub.f32 %v1309, %v1313
    %v1318 = vsub.f32 %v1310, %v1314
    %v1319 = vsub.f32 %v1311, %v1315
    %v1320 = vsub.f32 %v1312, %v1316
    %v1321 = vmax.f32 %v1317, 0.0
    %v1322 = vmax.f32 %v1318, 0.0
    %v1323 = vmax.f32 %v1319, 0.0
    %v1324 = vmax.f32 %v1320, 0.0
    %v1325 = vadd.f32 %v1321, 1e-05
    %v1326 = vadd.f32 %v1322, 1e-05
    %v1327 = vadd.f32 %v1323, 1e-05
    %v1328 = vadd.f32 %v1324, 1e-05
    %v1329 = vrsqrt.pop %v1325
    %v1330 = vrsqrt.pop %v1326
    %v1331 = vrsqrt.pop %v1327
    %v1332 = vrsqrt.pop %v1328
    %1334 = vset.pattern.permute.xlu0 0
    %1335 = vperm.xlu0 %1334, %v1265
    %v1336 = vpop.permute.xlu0 %1335
    %1339 = vset.pattern.permute.xlu0 0
    %1340 = vperm.xlu0 %1339, %v1266
    %v1341 = vpop.permute.xlu0 %1340
    %1344 = vset.pattern.permute.xlu0 0
    %1345 = vperm.xlu0 %1344, %v1267
    %v1346 = vpop.permute.xlu0 %1345
    %1349 = vset.pattern.permute.xlu0 0
    %1350 = vperm.xlu0 %1349, %v1268
    %v1351 = vpop.permute.xlu0 %1350
    %1354 = vset.pattern.permute.xlu0 0
    %1355 = vperm.xlu0 %1354, %v1269
    %v1356 = vpop.permute.xlu0 %1355
    %1359 = vset.pattern.permute.xlu0 0
    %1360 = vperm.xlu0 %1359, %v1270
    %v1361 = vpop.permute.xlu0 %1360
    %1364 = vset.pattern.permute.xlu0 0
    %1365 = vperm.xlu0 %1364, %v1271
    %v1366 = vpop.permute.xlu0 %1365
    %1369 = vset.pattern.permute.xlu0 0
    %1370 = vperm.xlu0 %1369, %v1272
    %v1371 = vpop.permute.xlu0 %1370
    %v1374 = vsel %vm360, %v1256, 0
    %v1377 = vsel %vm360, %v1257, 0
    %v1380 = vsel %vm360, %v1258, 0
    %v1383 = vsel %vm360, %v1259, 0
    %v1386 = vsel %vm360, %v1260, 0
    %v1389 = vsel %vm360, %v1261, 0
    %v1392 = vsel %vm360, %v1262, 0
    %v1395 = vsel %vm360, %v1263, 0
    %1397 = vmatprep.subr.mxu0 0.0
    %1398 = vmatpush1.msra.mxu0 0.0
    %1399 = vmatprep.subr.mxu0 0.0
    %1400 = vmatpush1.msra.mxu0 0.0
    %1401 = vmatprep.subr.mxu0 0.0
    %1402 = vmatpush1.msra.mxu0 0.0
    %1403 = vmatprep.subr.mxu0 0.0
    %1404 = vmatpush1.msra.mxu0 0.0
    %1405 = vmatprep.subr.mxu0 0.0
    %1406 = vmatpush1.msra.mxu0 0.0
    %1407 = vmatprep.subr.mxu0 0.0
    %1408 = vmatpush1.msra.mxu0 0.0
    %1409 = vmatprep.subr.mxu0 0.0
    %1410 = vmatpush1.msra.mxu0 0.0
    %1411 = vmatprep.subr.mxu0 0.0
    %1412 = vmatpush1.msra.mxu0 0.0
    %1413 = vmatprep.subr.mxu0 0.0
    %1414 = vmatpush1.msra.mxu0 0.0
    %1415 = vmatprep.subr.mxu0 0.0
    %1416 = vmatpush1.msra.mxu0 0.0
    %1417 = vmatprep.subr.mxu0 0.0
    %1418 = vmatpush1.msra.mxu0 0.0
    %1419 = vmatprep.subr.mxu0 0.0
    %1420 = vmatpush1.msra.mxu0 0.0
    %1421 = vmatprep.subr.mxu0 0.0
    %1422 = vmatpush1.msra.mxu0 0.0
    %1423 = vmatprep.subr.mxu0 0.0
    %1424 = vmatpush1.msra.mxu0 0.0
    %1425 = vmatprep.subr.mxu0 0.0
    %1426 = vmatpush1.msra.mxu0 0.0
    %1427 = vmatprep.subr.mxu0 0.0
    %1428 = vmatpush1.msra.mxu0 %v43
    %1429 = vmatprep.subr.mxu0 0.0
    %1430 = vmatpush2.msra.mxu0 0.0
    %1431 = vmatprep.subr.mxu0 0.0
    %1432 = vmatpush2.msra.mxu0 0.0
    %1433 = vmatprep.subr.mxu0 0.0
    %1434 = vmatpush2.msra.mxu0 0.0
    %1435 = vmatprep.subr.mxu0 0.0
    %1436 = vmatpush2.msra.mxu0 0.0
    %1437 = vmatprep.subr.mxu0 0.0
    %1438 = vmatpush2.msra.mxu0 0.0
    %1439 = vmatprep.subr.mxu0 0.0
    %1440 = vmatpush2.msra.mxu0 0.0
    %1441 = vmatprep.subr.mxu0 0.0
    %1442 = vmatpush2.msra.mxu0 0.0
    %1443 = vmatprep.subr.mxu0 0.0
    %1444 = vmatpush2.msra.mxu0 0.0
    %1445 = vmatprep.subr.mxu0 0.0
    %1446 = vmatpush2.msra.mxu0 0.0
    %1447 = vmatprep.subr.mxu0 0.0
    %1448 = vmatpush2.msra.mxu0 0.0
    %1449 = vmatprep.subr.mxu0 0.0
    %1450 = vmatpush2.msra.mxu0 0.0
    %1451 = vmatprep.subr.mxu0 0.0
    %1452 = vmatpush2.msra.mxu0 0.0
    %1453 = vmatprep.subr.mxu0 0.0
    %1454 = vmatpush2.msra.mxu0 0.0
    %1455 = vmatprep.subr.mxu0 0.0
    %1456 = vmatpush2.msra.mxu0 0.0
    %1457 = vmatprep.subr.mxu0 0.0
    %1458 = vmatpush2.msra.mxu0 0.0
    %1459 = vmatprep.subr.mxu0 0.0
    %1460 = vmatpush2.msra.mxu0 0.0
    %1461 = vmatprep.mubr.f32.mxu0 0.0
    %1462 = vmatmul.mubr.f32.gmra.mxu0 %v1374
    %v1463 = vpop.f32.mrf.mxu0
    %v1464 = vadd.f32 %v1336, %v1463
    %v1465 = vpop.f32.mrf.mxu0
    %1466 = vmatprep.mubr.f32.mxu0 0.0
    %1467 = vmatmul.mubr.f32.gmra.mxu0 %v1377
    %v1468 = vpop.f32.mrf.mxu0
    %v1469 = vadd.f32 %v1341, %v1468
    %v1470 = vpop.f32.mrf.mxu0
    %1471 = vmatprep.mubr.f32.mxu0 0.0
    %1472 = vmatmul.mubr.f32.gmra.mxu0 %v1380
    %v1473 = vpop.f32.mrf.mxu0
    %v1474 = vadd.f32 %v1346, %v1473
    %v1475 = vpop.f32.mrf.mxu0
    %1476 = vmatprep.mubr.f32.mxu0 0.0
    %1477 = vmatmul.mubr.f32.gmra.mxu0 %v1383
    %v1478 = vpop.f32.mrf.mxu0
    %v1479 = vadd.f32 %v1351, %v1478
    %v1480 = vpop.f32.mrf.mxu0
    %1481 = vmatprep.mubr.f32.mxu0 0.0
    %1482 = vmatmul.mubr.f32.gmra.mxu0 %v1386
    %v1483 = vpop.f32.mrf.mxu0
    %v1484 = vadd.f32 %v1356, %v1483
    %v1485 = vpop.f32.mrf.mxu0
    %1486 = vmatprep.mubr.f32.mxu0 0.0
    %1487 = vmatmul.mubr.f32.gmra.mxu0 %v1389
    %v1488 = vpop.f32.mrf.mxu0
    %v1489 = vadd.f32 %v1361, %v1488
    %v1490 = vpop.f32.mrf.mxu0
    %1491 = vmatprep.mubr.f32.mxu0 0.0
    %1492 = vmatmul.mubr.f32.gmra.mxu0 %v1392
    %v1493 = vpop.f32.mrf.mxu0
    %v1494 = vadd.f32 %v1366, %v1493
    %v1495 = vpop.f32.mrf.mxu0
    %1496 = vmatprep.mubr.f32.mxu0 0.0
    %1497 = vmatmul.mubr.f32.gmra.mxu0 %v1395
    %v1498 = vpop.f32.mrf.mxu0
    %v1499 = vadd.f32 %v1371, %v1498
    %v1500 = vpop.f32.mrf.mxu0
    %1501 = vdwg.mxu0
    %v1502 = vmul.f32 %v1464, %v1329
    %v1503 = vmul.f32 %v1469, %v1330
    %v1504 = vmul.f32 %v1474, %v1331
    %v1505 = vmul.f32 %v1479, %v1332
    %v1506 = vmul.f32 %v1305, %v1502
    %v1507 = vmul.f32 %v1306, %v1503
    %v1508 = vmul.f32 %v1307, %v1504
    %v1509 = vmul.f32 %v1308, %v1505
    %v1510 = vsub.f32 %v1484, %v1506
    %v1511 = vsub.f32 %v1489, %v1507
    %v1512 = vsub.f32 %v1494, %v1508
    %v1513 = vsub.f32 %v1499, %v1509
    %v1515 = vsel %vm502, %v1502, 0
    %v1518 = vsel %vm502, %v1503, 0
    %v1521 = vsel %vm502, %v1504, 0
    %v1524 = vsel %vm502, %v1505, 0
    %v1527 = vsel %vm502, %v1510, 0
    %v1530 = vsel %vm502, %v1511, 0
    %v1533 = vsel %vm502, %v1512, 0
    %v1536 = vsel %vm502, %v1513, 0
    %1538 = vmatprep.subr.mxu0 0.0
    %1539 = vmatpush1.msra.mxu0 0.0
    %1540 = vmatprep.subr.mxu0 0.0
    %1541 = vmatpush1.msra.mxu0 0.0
    %1542 = vmatprep.subr.mxu0 0.0
    %1543 = vmatpush1.msra.mxu0 0.0
    %1544 = vmatprep.subr.mxu0 0.0
    %1545 = vmatpush1.msra.mxu0 0.0
    %1546 = vmatprep.subr.mxu0 0.0
    %1547 = vmatpush1.msra.mxu0 0.0
    %1548 = vmatprep.subr.mxu0 0.0
    %1549 = vmatpush1.msra.mxu0 0.0
    %1550 = vmatprep.subr.mxu0 0.0
    %1551 = vmatpush1.msra.mxu0 0.0
    %1552 = vmatprep.subr.mxu0 0.0
    %1553 = vmatpush1.msra.mxu0 0.0
    %1554 = vmatprep.subr.mxu0 0.0
    %1555 = vmatpush1.msra.mxu0 0.0
    %1556 = vmatprep.subr.mxu0 0.0
    %1557 = vmatpush1.msra.mxu0 0.0
    %1558 = vmatprep.subr.mxu0 0.0
    %1559 = vmatpush1.msra.mxu0 0.0
    %1560 = vmatprep.subr.mxu0 0.0
    %1561 = vmatpush1.msra.mxu0 0.0
    %1562 = vmatprep.subr.mxu0 0.0
    %1563 = vmatpush1.msra.mxu0 0.0
    %1564 = vmatprep.subr.mxu0 0.0
    %1565 = vmatpush1.msra.mxu0 0.0
    %1566 = vmatprep.subr.mxu0 0.0
    %1567 = vmatpush1.msra.mxu0 0.0
    %1568 = vmatprep.subr.mxu0 %v532
    %1569 = vmatpush1.msra.mxu0 %v529
    %1570 = vmatprep.subr.mxu0 0.0
    %1571 = vmatpush2.msra.mxu0 0.0
    %1572 = vmatprep.subr.mxu0 0.0
    %1573 = vmatpush2.msra.mxu0 0.0
    %1574 = vmatprep.subr.mxu0 0.0
    %1575 = vmatpush2.msra.mxu0 0.0
    %1576 = vmatprep.subr.mxu0 0.0
    %1577 = vmatpush2.msra.mxu0 0.0
    %1578 = vmatprep.subr.mxu0 0.0
    %1579 = vmatpush2.msra.mxu0 0.0
    %1580 = vmatprep.subr.mxu0 0.0
    %1581 = vmatpush2.msra.mxu0 0.0
    %1582 = vmatprep.subr.mxu0 0.0
    %1583 = vmatpush2.msra.mxu0 0.0
    %1584 = vmatprep.subr.mxu0 0.0
    %1585 = vmatpush2.msra.mxu0 0.0
    %1586 = vmatprep.subr.mxu0 0.0
    %1587 = vmatpush2.msra.mxu0 0.0
    %1588 = vmatprep.subr.mxu0 0.0
    %1589 = vmatpush2.msra.mxu0 0.0
    %1590 = vmatprep.subr.mxu0 0.0
    %1591 = vmatpush2.msra.mxu0 0.0
    %1592 = vmatprep.subr.mxu0 0.0
    %1593 = vmatpush2.msra.mxu0 0.0
    %1594 = vmatprep.subr.mxu0 0.0
    %1595 = vmatpush2.msra.mxu0 0.0
    %1596 = vmatprep.subr.mxu0 0.0
    %1597 = vmatpush2.msra.mxu0 0.0
    %1598 = vmatprep.subr.mxu0 0.0
    %1599 = vmatpush2.msra.mxu0 0.0
    %1600 = vmatprep.subr.mxu0 0.0
    %1601 = vmatpush2.msra.mxu0 0.0
    %1602 = vmatprep.mubr.f32.mxu0 0.0
    %1603 = vmatmul.mubr.f32.gmra.mxu0 %v1515
    %v1604 = vpop.f32.mrf.mxu0
    %v1605 = vadd.f32 0.0, %v1604
    %v1606 = vpop.f32.mrf.mxu0
    %v1607 = vadd.f32 0.0, %v1606
    %1608 = vmatprep.mubr.f32.mxu0 0.0
    %1609 = vmatmul.mubr.f32.gmra.mxu0 %v1518
    %v1610 = vpop.f32.mrf.mxu0
    %v1611 = vadd.f32 0.0, %v1610
    %v1612 = vpop.f32.mrf.mxu0
    %v1613 = vadd.f32 0.0, %v1612
    %1614 = vmatprep.mubr.f32.mxu0 0.0
    %1615 = vmatmul.mubr.f32.gmra.mxu0 %v1521
    %v1616 = vpop.f32.mrf.mxu0
    %v1617 = vadd.f32 0.0, %v1616
    %v1618 = vpop.f32.mrf.mxu0
    %v1619 = vadd.f32 0.0, %v1618
    %1620 = vmatprep.mubr.f32.mxu0 0.0
    %1621 = vmatmul.mubr.f32.gmra.mxu0 %v1524
    %v1622 = vpop.f32.mrf.mxu0
    %v1623 = vadd.f32 0.0, %v1622
    %v1624 = vpop.f32.mrf.mxu0
    %v1625 = vadd.f32 0.0, %v1624
    %1626 = vmatprep.mubr.f32.mxu0 0.0
    %1627 = vmatmul.mubr.f32.gmra.mxu0 %v1527
    %v1628 = vpop.f32.mrf.mxu0
    %v1629 = vadd.f32 0.0, %v1628
    %v1630 = vpop.f32.mrf.mxu0
    %v1631 = vadd.f32 0.0, %v1630
    %1632 = vmatprep.mubr.f32.mxu0 0.0
    %1633 = vmatmul.mubr.f32.gmra.mxu0 %v1530
    %v1634 = vpop.f32.mrf.mxu0
    %v1635 = vadd.f32 0.0, %v1634
    %v1636 = vpop.f32.mrf.mxu0
    %v1637 = vadd.f32 0.0, %v1636
    %1638 = vmatprep.mubr.f32.mxu0 0.0
    %1639 = vmatmul.mubr.f32.gmra.mxu0 %v1533
    %v1640 = vpop.f32.mrf.mxu0
    %v1641 = vadd.f32 0.0, %v1640
    %v1642 = vpop.f32.mrf.mxu0
    %v1643 = vadd.f32 0.0, %v1642
    %1644 = vmatprep.mubr.f32.mxu0 0.0
    %1645 = vmatmul.mubr.f32.gmra.mxu0 %v1536
    %v1646 = vpop.f32.mrf.mxu0
    %v1647 = vadd.f32 0.0, %v1646
    %v1648 = vpop.f32.mrf.mxu0
    %v1649 = vadd.f32 0.0, %v1648
    %1650 = vdwg.mxu0
    %v1651 = vmul.f32 %v1247, %v1605
    %v1652 = vmul.f32 %v1248, %v1607
    %v1653 = vmul.f32 %v1249, %v1611
    %v1654 = vmul.f32 %v1250, %v1613
    %v1655 = vmul.f32 %v1251, %v1617
    %v1656 = vmul.f32 %v1252, %v1619
    %v1657 = vmul.f32 %v1253, %v1623
    %v1658 = vmul.f32 %v1254, %v1625
    %v1659 = vadd.f32 %v1651, %v1629
    %v1660 = vadd.f32 %v1652, %v1631
    %v1661 = vadd.f32 %v1653, %v1635
    %v1662 = vadd.f32 %v1654, %v1637
    %v1663 = vadd.f32 %v1655, %v1641
    %v1664 = vadd.f32 %v1656, %v1643
    %v1665 = vadd.f32 %v1657, %v1647
    %v1666 = vadd.f32 %v1658, %v1649
    %v1667 = vmax.f32 %v1659, 0.0
    %v1668 = vmax.f32 %v1660, 0.0
    %v1669 = vmax.f32 %v1661, 0.0
    %v1670 = vmax.f32 %v1662, 0.0
    %v1671 = vmax.f32 %v1663, 0.0
    %v1672 = vmax.f32 %v1664, 0.0
    %v1673 = vmax.f32 %v1665, 0.0
    %v1674 = vmax.f32 %v1666, 0.0
    %s1675 = scalar_lea.vmem %s6, 32
    %v1676 = vld [vmem:[%s1675] sm:$0xf]
    %v1677 = vld [vmem:[%s1675 + $0x4] sm:$0xf]
    %v1678 = vld [vmem:[%s1675 + $0x8] sm:$0xf]
    %v1679 = vld [vmem:[%s1675 + $0xc] sm:$0xf]
    %v1680 = vpack.c.bf16 %v1669, %v1667
    %v1681 = vpack.c.bf16 %v1670, %v1668
    %v1682 = vpack.c.bf16 %v1673, %v1671
    %v1683 = vpack.c.bf16 %v1674, %v1672
    %v1688 = vunpack.c.l.b16 %v1676
    %v1689 = vunpack.c.l.b16 %v1677
    %v1690 = vunpack.c.l.b16 %v1678
    %v1691 = vunpack.c.l.b16 %v1679
    %v1692 = vpack.c.b16 %v1689, %v1688
    %v1693 = vpack.c.b16 %v1691, %v1690
    %v1695 = vsel %vm689, %v1692, 0
    %v1698 = vsel %vm689, %v1693, 0
    %1700 = vmatprep.subr.bf16.mxu0 0
    %1701 = vmatpush1.bf16.msra.mxu0 0
    %1702 = vmatprep.subr.bf16.mxu0 0
    %1703 = vmatpush1.bf16.msra.mxu0 0
    %1704 = vmatprep.subr.bf16.mxu0 0
    %1705 = vmatpush1.bf16.msra.mxu0 0
    %1706 = vmatprep.subr.bf16.mxu0 0
    %1707 = vmatpush1.bf16.msra.mxu0 0
    %1708 = vmatprep.subr.bf16.mxu0 0
    %1709 = vmatpush1.bf16.msra.mxu0 0
    %1710 = vmatprep.subr.bf16.mxu0 0
    %1711 = vmatpush1.bf16.msra.mxu0 0
    %1712 = vmatprep.subr.bf16.mxu0 %v1683
    %1713 = vmatpush1.bf16.msra.mxu0 %v1682
    %1714 = vmatprep.subr.bf16.mxu0 %v1681
    %1715 = vmatpush1.bf16.msra.mxu0 %v1680
    %1716 = vmatprep.subr.bf16.mxu0 0
    %1717 = vmatpush2.bf16.msra.mxu0 0
    %1718 = vmatprep.subr.bf16.mxu0 0
    %1719 = vmatpush2.bf16.msra.mxu0 0
    %1720 = vmatprep.subr.bf16.mxu0 0
    %1721 = vmatpush2.bf16.msra.mxu0 0
    %1722 = vmatprep.subr.bf16.mxu0 0
    %1723 = vmatpush2.bf16.msra.mxu0 0
    %1724 = vmatprep.subr.bf16.mxu0 0
    %1725 = vmatpush2.bf16.msra.mxu0 0
    %1726 = vmatprep.subr.bf16.mxu0 0
    %1727 = vmatpush2.bf16.msra.mxu0 0
    %1728 = vmatprep.subr.bf16.mxu0 0
    %1729 = vmatpush2.bf16.msra.mxu0 0
    %1730 = vmatprep.subr.bf16.mxu0 0
    %1731 = vmatpush2.bf16.msra.mxu0 0
    %1732 = vmatprep.mubr.bf16.mxu0 0
    %1733 = vmatmul.mubr.bf16.gmra.mxu0 %v1695
    %v1734 = vpop.f32.mrf.mxu0
    %v1735 = vadd.f32 0.0, %v1734
    %v1736 = vpop.f32.mrf.mxu0
    %v1737 = vadd.f32 0.0, %v1736
    %v1738 = vpop.f32.mrf.mxu0
    %v1739 = vadd.f32 0.0, %v1738
    %v1740 = vpop.f32.mrf.mxu0
    %v1741 = vadd.f32 0.0, %v1740
    %1742 = vmatprep.mubr.bf16.mxu0 0
    %1743 = vmatmul.mubr.bf16.gmra.mxu0 %v1698
    %v1744 = vpop.f32.mrf.mxu0
    %v1745 = vadd.f32 0.0, %v1744
    %v1746 = vpop.f32.mrf.mxu0
    %v1747 = vadd.f32 0.0, %v1746
    %v1748 = vpop.f32.mrf.mxu0
    %v1749 = vadd.f32 0.0, %v1748
    %v1750 = vpop.f32.mrf.mxu0
    %v1751 = vadd.f32 0.0, %v1750
    %1752 = vdwg.mxu0
    %s1753 = scalar_lea.vmem %s4, 192
    %v1754 = vld [vmem:[%s1753] sm:$0xff]
    %v1755 = vld [vmem:[%s1753 + $0x8] sm:$0xff]
    %v1756 = vld [vmem:[%s1753 + $0x10] sm:$0xff]
    %v1757 = vld [vmem:[%s1753 + $0x18] sm:$0xff]
    %v1758 = vld [vmem:[%s1753 + $0x20] sm:$0xff]
    %v1759 = vld [vmem:[%s1753 + $0x28] sm:$0xff]
    %v1760 = vld [vmem:[%s1753 + $0x30] sm:$0xff]
    %v1761 = vld [vmem:[%s1753 + $0x38] sm:$0xff]
    %s1762 = scalar_lea.vmem %s5, 192
    %v1763 = vld [vmem:[%s1762] sm:$0xff]
    %v1764 = vld [vmem:[%s1762 + $0x8] sm:$0xff]
    %v1765 = vld [vmem:[%s1762 + $0x10] sm:$0xff]
    %v1766 = vld [vmem:[%s1762 + $0x18] sm:$0xff]
    %v1767 = vld [vmem:[%s1762 + $0x20] sm:$0xff]
    %v1768 = vld [vmem:[%s1762 + $0x28] sm:$0xff]
    %v1769 = vld [vmem:[%s1762 + $0x30] sm:$0xff]
    %v1770 = vld [vmem:[%s1762 + $0x38] sm:$0xff]
    %v1771 = vadd.f32 %v1735, %v1737
    %1772 = vadd.xlane.f32.xlu0 %v1771
    %v1773 = vpop.xlane.xlu0 %1772
    %v1774 = vadd.f32 %v1739, %v1741
    %1775 = vadd.xlane.f32.xlu0 %v1774
    %v1776 = vpop.xlane.xlu0 %1775
    %v1777 = vadd.f32 %v1745, %v1747
    %1778 = vadd.xlane.f32.xlu0 %v1777
    %v1779 = vpop.xlane.xlu0 %1778
    %v1780 = vadd.f32 %v1749, %v1751
    %1781 = vadd.xlane.f32.xlu0 %v1780
    %v1782 = vpop.xlane.xlu0 %1781
    %v1783 = vmul.f32 %v1735, %v1735
    %v1784 = vmul.f32 %v1737, %v1737
    %v1785 = vmul.f32 %v1739, %v1739
    %v1786 = vmul.f32 %v1741, %v1741
    %v1787 = vmul.f32 %v1745, %v1745
    %v1788 = vmul.f32 %v1747, %v1747
    %v1789 = vmul.f32 %v1749, %v1749
    %v1790 = vmul.f32 %v1751, %v1751
    %v1791 = vadd.f32 %v1783, %v1784
    %1792 = vadd.xlane.f32.xlu0 %v1791
    %v1793 = vpop.xlane.xlu0 %1792
    %v1794 = vadd.f32 %v1785, %v1786
    %1795 = vadd.xlane.f32.xlu0 %v1794
    %v1796 = vpop.xlane.xlu0 %1795
    %v1797 = vadd.f32 %v1787, %v1788
    %1798 = vadd.xlane.f32.xlu0 %v1797
    %v1799 = vpop.xlane.xlu0 %1798
    %v1800 = vadd.f32 %v1789, %v1790
    %1801 = vadd.xlane.f32.xlu0 %v1800
    %v1802 = vpop.xlane.xlu0 %1801
    %v1803 = vmul.f32 %v1773, 0.00390625
    %v1804 = vmul.f32 %v1776, 0.00390625
    %v1805 = vmul.f32 %v1779, 0.00390625
    %v1806 = vmul.f32 %v1782, 0.00390625
    %v1807 = vmul.f32 %v1793, 0.00390625
    %v1808 = vmul.f32 %v1796, 0.00390625
    %v1809 = vmul.f32 %v1799, 0.00390625
    %v1810 = vmul.f32 %v1802, 0.00390625
    %v1811 = vmul.f32 %v1803, %v1803
    %v1812 = vmul.f32 %v1804, %v1804
    %v1813 = vmul.f32 %v1805, %v1805
    %v1814 = vmul.f32 %v1806, %v1806
    %v1815 = vsub.f32 %v1807, %v1811
    %v1816 = vsub.f32 %v1808, %v1812
    %v1817 = vsub.f32 %v1809, %v1813
    %v1818 = vsub.f32 %v1810, %v1814
    %v1819 = vmax.f32 %v1815, 0.0
    %v1820 = vmax.f32 %v1816, 0.0
    %v1821 = vmax.f32 %v1817, 0.0
    %v1822 = vmax.f32 %v1818, 0.0
    %v1823 = vadd.f32 %v1819, 1e-05
    %v1824 = vadd.f32 %v1820, 1e-05
    %v1825 = vadd.f32 %v1821, 1e-05
    %v1826 = vadd.f32 %v1822, 1e-05
    %v1827 = vrsqrt.pop %v1823
    %v1828 = vrsqrt.pop %v1824
    %v1829 = vrsqrt.pop %v1825
    %v1830 = vrsqrt.pop %v1826
    %1832 = vset.pattern.permute.xlu0 0
    %1833 = vperm.xlu0 %1832, %v1763
    %v1834 = vpop.permute.xlu0 %1833
    %1837 = vset.pattern.permute.xlu0 0
    %1838 = vperm.xlu0 %1837, %v1764
    %v1839 = vpop.permute.xlu0 %1838
    %1842 = vset.pattern.permute.xlu0 0
    %1843 = vperm.xlu0 %1842, %v1765
    %v1844 = vpop.permute.xlu0 %1843
    %1847 = vset.pattern.permute.xlu0 0
    %1848 = vperm.xlu0 %1847, %v1766
    %v1849 = vpop.permute.xlu0 %1848
    %1852 = vset.pattern.permute.xlu0 0
    %1853 = vperm.xlu0 %1852, %v1767
    %v1854 = vpop.permute.xlu0 %1853
    %1857 = vset.pattern.permute.xlu0 0
    %1858 = vperm.xlu0 %1857, %v1768
    %v1859 = vpop.permute.xlu0 %1858
    %1862 = vset.pattern.permute.xlu0 0
    %1863 = vperm.xlu0 %1862, %v1769
    %v1864 = vpop.permute.xlu0 %1863
    %1867 = vset.pattern.permute.xlu0 0
    %1868 = vperm.xlu0 %1867, %v1770
    %v1869 = vpop.permute.xlu0 %1868
    %v1872 = vsel %vm360, %v1754, 0
    %v1875 = vsel %vm360, %v1755, 0
    %v1878 = vsel %vm360, %v1756, 0
    %v1881 = vsel %vm360, %v1757, 0
    %v1884 = vsel %vm360, %v1758, 0
    %v1887 = vsel %vm360, %v1759, 0
    %v1890 = vsel %vm360, %v1760, 0
    %v1893 = vsel %vm360, %v1761, 0
    %1895 = vmatprep.subr.mxu0 0.0
    %1896 = vmatpush1.msra.mxu0 0.0
    %1897 = vmatprep.subr.mxu0 0.0
    %1898 = vmatpush1.msra.mxu0 0.0
    %1899 = vmatprep.subr.mxu0 0.0
    %1900 = vmatpush1.msra.mxu0 0.0
    %1901 = vmatprep.subr.mxu0 0.0
    %1902 = vmatpush1.msra.mxu0 0.0
    %1903 = vmatprep.subr.mxu0 0.0
    %1904 = vmatpush1.msra.mxu0 0.0
    %1905 = vmatprep.subr.mxu0 0.0
    %1906 = vmatpush1.msra.mxu0 0.0
    %1907 = vmatprep.subr.mxu0 0.0
    %1908 = vmatpush1.msra.mxu0 0.0
    %1909 = vmatprep.subr.mxu0 0.0
    %1910 = vmatpush1.msra.mxu0 0.0
    %1911 = vmatprep.subr.mxu0 0.0
    %1912 = vmatpush1.msra.mxu0 0.0
    %1913 = vmatprep.subr.mxu0 0.0
    %1914 = vmatpush1.msra.mxu0 0.0
    %1915 = vmatprep.subr.mxu0 0.0
    %1916 = vmatpush1.msra.mxu0 0.0
    %1917 = vmatprep.subr.mxu0 0.0
    %1918 = vmatpush1.msra.mxu0 0.0
    %1919 = vmatprep.subr.mxu0 0.0
    %1920 = vmatpush1.msra.mxu0 0.0
    %1921 = vmatprep.subr.mxu0 0.0
    %1922 = vmatpush1.msra.mxu0 0.0
    %1923 = vmatprep.subr.mxu0 0.0
    %1924 = vmatpush1.msra.mxu0 0.0
    %1925 = vmatprep.subr.mxu0 0.0
    %1926 = vmatpush1.msra.mxu0 %v43
    %1927 = vmatprep.subr.mxu0 0.0
    %1928 = vmatpush2.msra.mxu0 0.0
    %1929 = vmatprep.subr.mxu0 0.0
    %1930 = vmatpush2.msra.mxu0 0.0
    %1931 = vmatprep.subr.mxu0 0.0
    %1932 = vmatpush2.msra.mxu0 0.0
    %1933 = vmatprep.subr.mxu0 0.0
    %1934 = vmatpush2.msra.mxu0 0.0
    %1935 = vmatprep.subr.mxu0 0.0
    %1936 = vmatpush2.msra.mxu0 0.0
    %1937 = vmatprep.subr.mxu0 0.0
    %1938 = vmatpush2.msra.mxu0 0.0
    %1939 = vmatprep.subr.mxu0 0.0
    %1940 = vmatpush2.msra.mxu0 0.0
    %1941 = vmatprep.subr.mxu0 0.0
    %1942 = vmatpush2.msra.mxu0 0.0
    %1943 = vmatprep.subr.mxu0 0.0
    %1944 = vmatpush2.msra.mxu0 0.0
    %1945 = vmatprep.subr.mxu0 0.0
    %1946 = vmatpush2.msra.mxu0 0.0
    %1947 = vmatprep.subr.mxu0 0.0
    %1948 = vmatpush2.msra.mxu0 0.0
    %1949 = vmatprep.subr.mxu0 0.0
    %1950 = vmatpush2.msra.mxu0 0.0
    %1951 = vmatprep.subr.mxu0 0.0
    %1952 = vmatpush2.msra.mxu0 0.0
    %1953 = vmatprep.subr.mxu0 0.0
    %1954 = vmatpush2.msra.mxu0 0.0
    %1955 = vmatprep.subr.mxu0 0.0
    %1956 = vmatpush2.msra.mxu0 0.0
    %1957 = vmatprep.subr.mxu0 0.0
    %1958 = vmatpush2.msra.mxu0 0.0
    %1959 = vmatprep.mubr.f32.mxu0 0.0
    %1960 = vmatmul.mubr.f32.gmra.mxu0 %v1872
    %v1961 = vpop.f32.mrf.mxu0
    %v1962 = vadd.f32 %v1834, %v1961
    %v1963 = vpop.f32.mrf.mxu0
    %1964 = vmatprep.mubr.f32.mxu0 0.0
    %1965 = vmatmul.mubr.f32.gmra.mxu0 %v1875
    %v1966 = vpop.f32.mrf.mxu0
    %v1967 = vadd.f32 %v1839, %v1966
    %v1968 = vpop.f32.mrf.mxu0
    %1969 = vmatprep.mubr.f32.mxu0 0.0
    %1970 = vmatmul.mubr.f32.gmra.mxu0 %v1878
    %v1971 = vpop.f32.mrf.mxu0
    %v1972 = vadd.f32 %v1844, %v1971
    %v1973 = vpop.f32.mrf.mxu0
    %1974 = vmatprep.mubr.f32.mxu0 0.0
    %1975 = vmatmul.mubr.f32.gmra.mxu0 %v1881
    %v1976 = vpop.f32.mrf.mxu0
    %v1977 = vadd.f32 %v1849, %v1976
    %v1978 = vpop.f32.mrf.mxu0
    %1979 = vmatprep.mubr.f32.mxu0 0.0
    %1980 = vmatmul.mubr.f32.gmra.mxu0 %v1884
    %v1981 = vpop.f32.mrf.mxu0
    %v1982 = vadd.f32 %v1854, %v1981
    %v1983 = vpop.f32.mrf.mxu0
    %1984 = vmatprep.mubr.f32.mxu0 0.0
    %1985 = vmatmul.mubr.f32.gmra.mxu0 %v1887
    %v1986 = vpop.f32.mrf.mxu0
    %v1987 = vadd.f32 %v1859, %v1986
    %v1988 = vpop.f32.mrf.mxu0
    %1989 = vmatprep.mubr.f32.mxu0 0.0
    %1990 = vmatmul.mubr.f32.gmra.mxu0 %v1890
    %v1991 = vpop.f32.mrf.mxu0
    %v1992 = vadd.f32 %v1864, %v1991
    %v1993 = vpop.f32.mrf.mxu0
    %1994 = vmatprep.mubr.f32.mxu0 0.0
    %1995 = vmatmul.mubr.f32.gmra.mxu0 %v1893
    %v1996 = vpop.f32.mrf.mxu0
    %v1997 = vadd.f32 %v1869, %v1996
    %v1998 = vpop.f32.mrf.mxu0
    %1999 = vdwg.mxu0
    %v2000 = vmul.f32 %v1962, %v1827
    %v2001 = vmul.f32 %v1967, %v1828
    %v2002 = vmul.f32 %v1972, %v1829
    %v2003 = vmul.f32 %v1977, %v1830
    %v2004 = vmul.f32 %v1803, %v2000
    %v2005 = vmul.f32 %v1804, %v2001
    %v2006 = vmul.f32 %v1805, %v2002
    %v2007 = vmul.f32 %v1806, %v2003
    %v2008 = vsub.f32 %v1982, %v2004
    %v2009 = vsub.f32 %v1987, %v2005
    %v2010 = vsub.f32 %v1992, %v2006
    %v2011 = vsub.f32 %v1997, %v2007
    %v2013 = vsel %vm502, %v2000, 0
    %v2016 = vsel %vm502, %v2001, 0
    %v2019 = vsel %vm502, %v2002, 0
    %v2022 = vsel %vm502, %v2003, 0
    %v2025 = vsel %vm502, %v2008, 0
    %v2028 = vsel %vm502, %v2009, 0
    %v2031 = vsel %vm502, %v2010, 0
    %v2034 = vsel %vm502, %v2011, 0
    %2036 = vmatprep.subr.mxu0 0.0
    %2037 = vmatpush1.msra.mxu0 0.0
    %2038 = vmatprep.subr.mxu0 0.0
    %2039 = vmatpush1.msra.mxu0 0.0
    %2040 = vmatprep.subr.mxu0 0.0
    %2041 = vmatpush1.msra.mxu0 0.0
    %2042 = vmatprep.subr.mxu0 0.0
    %2043 = vmatpush1.msra.mxu0 0.0
    %2044 = vmatprep.subr.mxu0 0.0
    %2045 = vmatpush1.msra.mxu0 0.0
    %2046 = vmatprep.subr.mxu0 0.0
    %2047 = vmatpush1.msra.mxu0 0.0
    %2048 = vmatprep.subr.mxu0 0.0
    %2049 = vmatpush1.msra.mxu0 0.0
    %2050 = vmatprep.subr.mxu0 0.0
    %2051 = vmatpush1.msra.mxu0 0.0
    %2052 = vmatprep.subr.mxu0 0.0
    %2053 = vmatpush1.msra.mxu0 0.0
    %2054 = vmatprep.subr.mxu0 0.0
    %2055 = vmatpush1.msra.mxu0 0.0
    %2056 = vmatprep.subr.mxu0 0.0
    %2057 = vmatpush1.msra.mxu0 0.0
    %2058 = vmatprep.subr.mxu0 0.0
    %2059 = vmatpush1.msra.mxu0 0.0
    %2060 = vmatprep.subr.mxu0 0.0
    %2061 = vmatpush1.msra.mxu0 0.0
    %2062 = vmatprep.subr.mxu0 0.0
    %2063 = vmatpush1.msra.mxu0 0.0
    %2064 = vmatprep.subr.mxu0 0.0
    %2065 = vmatpush1.msra.mxu0 0.0
    %2066 = vmatprep.subr.mxu0 %v532
    %2067 = vmatpush1.msra.mxu0 %v529
    %2068 = vmatprep.subr.mxu0 0.0
    %2069 = vmatpush2.msra.mxu0 0.0
    %2070 = vmatprep.subr.mxu0 0.0
    %2071 = vmatpush2.msra.mxu0 0.0
    %2072 = vmatprep.subr.mxu0 0.0
    %2073 = vmatpush2.msra.mxu0 0.0
    %2074 = vmatprep.subr.mxu0 0.0
    %2075 = vmatpush2.msra.mxu0 0.0
    %2076 = vmatprep.subr.mxu0 0.0
    %2077 = vmatpush2.msra.mxu0 0.0
    %2078 = vmatprep.subr.mxu0 0.0
    %2079 = vmatpush2.msra.mxu0 0.0
    %2080 = vmatprep.subr.mxu0 0.0
    %2081 = vmatpush2.msra.mxu0 0.0
    %2082 = vmatprep.subr.mxu0 0.0
    %2083 = vmatpush2.msra.mxu0 0.0
    %2084 = vmatprep.subr.mxu0 0.0
    %2085 = vmatpush2.msra.mxu0 0.0
    %2086 = vmatprep.subr.mxu0 0.0
    %2087 = vmatpush2.msra.mxu0 0.0
    %2088 = vmatprep.subr.mxu0 0.0
    %2089 = vmatpush2.msra.mxu0 0.0
    %2090 = vmatprep.subr.mxu0 0.0
    %2091 = vmatpush2.msra.mxu0 0.0
    %2092 = vmatprep.subr.mxu0 0.0
    %2093 = vmatpush2.msra.mxu0 0.0
    %2094 = vmatprep.subr.mxu0 0.0
    %2095 = vmatpush2.msra.mxu0 0.0
    %2096 = vmatprep.subr.mxu0 0.0
    %2097 = vmatpush2.msra.mxu0 0.0
    %2098 = vmatprep.subr.mxu0 0.0
    %2099 = vmatpush2.msra.mxu0 0.0
    %2100 = vmatprep.mubr.f32.mxu0 0.0
    %2101 = vmatmul.mubr.f32.gmra.mxu0 %v2013
    %v2102 = vpop.f32.mrf.mxu0
    %v2103 = vadd.f32 0.0, %v2102
    %v2104 = vpop.f32.mrf.mxu0
    %v2105 = vadd.f32 0.0, %v2104
    %2106 = vmatprep.mubr.f32.mxu0 0.0
    %2107 = vmatmul.mubr.f32.gmra.mxu0 %v2016
    %v2108 = vpop.f32.mrf.mxu0
    %v2109 = vadd.f32 0.0, %v2108
    %v2110 = vpop.f32.mrf.mxu0
    %v2111 = vadd.f32 0.0, %v2110
    %2112 = vmatprep.mubr.f32.mxu0 0.0
    %2113 = vmatmul.mubr.f32.gmra.mxu0 %v2019
    %v2114 = vpop.f32.mrf.mxu0
    %v2115 = vadd.f32 0.0, %v2114
    %v2116 = vpop.f32.mrf.mxu0
    %v2117 = vadd.f32 0.0, %v2116
    %2118 = vmatprep.mubr.f32.mxu0 0.0
    %2119 = vmatmul.mubr.f32.gmra.mxu0 %v2022
    %v2120 = vpop.f32.mrf.mxu0
    %v2121 = vadd.f32 0.0, %v2120
    %v2122 = vpop.f32.mrf.mxu0
    %v2123 = vadd.f32 0.0, %v2122
    %2124 = vmatprep.mubr.f32.mxu0 0.0
    %2125 = vmatmul.mubr.f32.gmra.mxu0 %v2025
    %v2126 = vpop.f32.mrf.mxu0
    %v2127 = vadd.f32 0.0, %v2126
    %v2128 = vpop.f32.mrf.mxu0
    %v2129 = vadd.f32 0.0, %v2128
    %2130 = vmatprep.mubr.f32.mxu0 0.0
    %2131 = vmatmul.mubr.f32.gmra.mxu0 %v2028
    %v2132 = vpop.f32.mrf.mxu0
    %v2133 = vadd.f32 0.0, %v2132
    %v2134 = vpop.f32.mrf.mxu0
    %v2135 = vadd.f32 0.0, %v2134
    %2136 = vmatprep.mubr.f32.mxu0 0.0
    %2137 = vmatmul.mubr.f32.gmra.mxu0 %v2031
    %v2138 = vpop.f32.mrf.mxu0
    %v2139 = vadd.f32 0.0, %v2138
    %v2140 = vpop.f32.mrf.mxu0
    %v2141 = vadd.f32 0.0, %v2140
    %2142 = vmatprep.mubr.f32.mxu0 0.0
    %2143 = vmatmul.mubr.f32.gmra.mxu0 %v2034
    %v2144 = vpop.f32.mrf.mxu0
    %v2145 = vadd.f32 0.0, %v2144
    %v2146 = vpop.f32.mrf.mxu0
    %v2147 = vadd.f32 0.0, %v2146
    %2148 = vdwg.mxu0
    %v2149 = vmul.f32 %v1735, %v2103
    %v2150 = vmul.f32 %v1737, %v2105
    %v2151 = vmul.f32 %v1739, %v2109
    %v2152 = vmul.f32 %v1741, %v2111
    %v2153 = vmul.f32 %v1745, %v2115
    %v2154 = vmul.f32 %v1747, %v2117
    %v2155 = vmul.f32 %v1749, %v2121
    %v2156 = vmul.f32 %v1751, %v2123
    %v2157 = vadd.f32 %v2149, %v2127
    %v2158 = vadd.f32 %v2150, %v2129
    %v2159 = vadd.f32 %v2151, %v2133
    %v2160 = vadd.f32 %v2152, %v2135
    %v2161 = vadd.f32 %v2153, %v2139
    %v2162 = vadd.f32 %v2154, %v2141
    %v2163 = vadd.f32 %v2155, %v2145
    %v2164 = vadd.f32 %v2156, %v2147
    %v2165 = vmax.f32 %v2157, 0.0
    %v2166 = vmax.f32 %v2158, 0.0
    %v2167 = vmax.f32 %v2159, 0.0
    %v2168 = vmax.f32 %v2160, 0.0
    %v2169 = vmax.f32 %v2161, 0.0
    %v2170 = vmax.f32 %v2162, 0.0
    %v2171 = vmax.f32 %v2163, 0.0
    %v2172 = vmax.f32 %v2164, 0.0
    %s2173 = scalar_lea.vmem %s6, 48
    %v2174 = vld [vmem:[%s2173] sm:$0xf]
    %v2175 = vld [vmem:[%s2173 + $0x4] sm:$0xf]
    %v2176 = vld [vmem:[%s2173 + $0x8] sm:$0xf]
    %v2177 = vld [vmem:[%s2173 + $0xc] sm:$0xf]
    %v2178 = vpack.c.bf16 %v2167, %v2165
    %v2179 = vpack.c.bf16 %v2168, %v2166
    %v2180 = vpack.c.bf16 %v2171, %v2169
    %v2181 = vpack.c.bf16 %v2172, %v2170
    %v2186 = vunpack.c.l.b16 %v2174
    %v2187 = vunpack.c.l.b16 %v2175
    %v2188 = vunpack.c.l.b16 %v2176
    %v2189 = vunpack.c.l.b16 %v2177
    %v2190 = vpack.c.b16 %v2187, %v2186
    %v2191 = vpack.c.b16 %v2189, %v2188
    %v2193 = vsel %vm689, %v2190, 0
    %v2196 = vsel %vm689, %v2191, 0
    %2198 = vmatprep.subr.bf16.mxu0 0
    %2199 = vmatpush1.bf16.msra.mxu0 0
    %2200 = vmatprep.subr.bf16.mxu0 0
    %2201 = vmatpush1.bf16.msra.mxu0 0
    %2202 = vmatprep.subr.bf16.mxu0 0
    %2203 = vmatpush1.bf16.msra.mxu0 0
    %2204 = vmatprep.subr.bf16.mxu0 0
    %2205 = vmatpush1.bf16.msra.mxu0 0
    %2206 = vmatprep.subr.bf16.mxu0 0
    %2207 = vmatpush1.bf16.msra.mxu0 0
    %2208 = vmatprep.subr.bf16.mxu0 0
    %2209 = vmatpush1.bf16.msra.mxu0 0
    %2210 = vmatprep.subr.bf16.mxu0 %v2181
    %2211 = vmatpush1.bf16.msra.mxu0 %v2180
    %2212 = vmatprep.subr.bf16.mxu0 %v2179
    %2213 = vmatpush1.bf16.msra.mxu0 %v2178
    %2214 = vmatprep.subr.bf16.mxu0 0
    %2215 = vmatpush2.bf16.msra.mxu0 0
    %2216 = vmatprep.subr.bf16.mxu0 0
    %2217 = vmatpush2.bf16.msra.mxu0 0
    %2218 = vmatprep.subr.bf16.mxu0 0
    %2219 = vmatpush2.bf16.msra.mxu0 0
    %2220 = vmatprep.subr.bf16.mxu0 0
    %2221 = vmatpush2.bf16.msra.mxu0 0
    %2222 = vmatprep.subr.bf16.mxu0 0
    %2223 = vmatpush2.bf16.msra.mxu0 0
    %2224 = vmatprep.subr.bf16.mxu0 0
    %2225 = vmatpush2.bf16.msra.mxu0 0
    %2226 = vmatprep.subr.bf16.mxu0 0
    %2227 = vmatpush2.bf16.msra.mxu0 0
    %2228 = vmatprep.subr.bf16.mxu0 0
    %2229 = vmatpush2.bf16.msra.mxu0 0
    %2230 = vmatprep.mubr.bf16.mxu0 0
    %2231 = vmatmul.mubr.bf16.gmra.mxu0 %v2193
    %v2232 = vpop.f32.mrf.mxu0
    %v2233 = vadd.f32 0.0, %v2232
    %v2234 = vpop.f32.mrf.mxu0
    %v2235 = vadd.f32 0.0, %v2234
    %v2236 = vpop.f32.mrf.mxu0
    %v2237 = vadd.f32 0.0, %v2236
    %v2238 = vpop.f32.mrf.mxu0
    %v2239 = vadd.f32 0.0, %v2238
    %2240 = vmatprep.mubr.bf16.mxu0 0
    %2241 = vmatmul.mubr.bf16.gmra.mxu0 %v2196
    %v2242 = vpop.f32.mrf.mxu0
    %v2243 = vadd.f32 0.0, %v2242
    %v2244 = vpop.f32.mrf.mxu0
    %v2245 = vadd.f32 0.0, %v2244
    %v2246 = vpop.f32.mrf.mxu0
    %v2247 = vadd.f32 0.0, %v2246
    %v2248 = vpop.f32.mrf.mxu0
    %v2249 = vadd.f32 0.0, %v2248
    %2250 = vdwg.mxu0
    %v2251 = vadd.f32 %v1247, %v2233
    %v2252 = vadd.f32 %v1248, %v2235
    %v2253 = vadd.f32 %v1249, %v2237
    %v2254 = vadd.f32 %v1250, %v2239
    %v2255 = vadd.f32 %v1251, %v2243
    %v2256 = vadd.f32 %v1252, %v2245
    %v2257 = vadd.f32 %v1253, %v2247
    %v2258 = vadd.f32 %v1254, %v2249
    %v2259 = vld [vmem:[%s7] sm:$0xff]
    %v2260 = vld [vmem:[%s7 + $0x8] sm:$0xff]
    %v2261 = vld [vmem:[%s7 + $0x10] sm:$0xff]
    %v2262 = vld [vmem:[%s7 + $0x18] sm:$0xff]
    %v2263 = vld [vmem:[%s7 + $0x20] sm:$0xff]
    %v2264 = vld [vmem:[%s7 + $0x28] sm:$0xff]
    %v2265 = vld [vmem:[%s7 + $0x30] sm:$0xff]
    %v2266 = vld [vmem:[%s7 + $0x38] sm:$0xff]
    %v2267 = vld [vmem:[%s8] sm:$0xff]
    %v2268 = vld [vmem:[%s8 + $0x8] sm:$0xff]
    %v2269 = vld [vmem:[%s8 + $0x10] sm:$0xff]
    %v2270 = vld [vmem:[%s8 + $0x18] sm:$0xff]
    %v2271 = vld [vmem:[%s8 + $0x20] sm:$0xff]
    %v2272 = vld [vmem:[%s8 + $0x28] sm:$0xff]
    %v2273 = vld [vmem:[%s8 + $0x30] sm:$0xff]
    %v2274 = vld [vmem:[%s8 + $0x38] sm:$0xff]
    %v2275 = vadd.f32 %v2251, %v2252
    %2276 = vadd.xlane.f32.xlu0 %v2275
    %v2277 = vpop.xlane.xlu0 %2276
    %v2278 = vadd.f32 %v2253, %v2254
    %2279 = vadd.xlane.f32.xlu0 %v2278
    %v2280 = vpop.xlane.xlu0 %2279
    %v2281 = vadd.f32 %v2255, %v2256
    %2282 = vadd.xlane.f32.xlu0 %v2281
    %v2283 = vpop.xlane.xlu0 %2282
    %v2284 = vadd.f32 %v2257, %v2258
    %2285 = vadd.xlane.f32.xlu0 %v2284
    %v2286 = vpop.xlane.xlu0 %2285
    %v2287 = vmul.f32 %v2251, %v2251
    %v2288 = vmul.f32 %v2252, %v2252
    %v2289 = vmul.f32 %v2253, %v2253
    %v2290 = vmul.f32 %v2254, %v2254
    %v2291 = vmul.f32 %v2255, %v2255
    %v2292 = vmul.f32 %v2256, %v2256
    %v2293 = vmul.f32 %v2257, %v2257
    %v2294 = vmul.f32 %v2258, %v2258
    %v2295 = vadd.f32 %v2287, %v2288
    %2296 = vadd.xlane.f32.xlu0 %v2295
    %v2297 = vpop.xlane.xlu0 %2296
    %v2298 = vadd.f32 %v2289, %v2290
    %2299 = vadd.xlane.f32.xlu0 %v2298
    %v2300 = vpop.xlane.xlu0 %2299
    %v2301 = vadd.f32 %v2291, %v2292
    %2302 = vadd.xlane.f32.xlu0 %v2301
    %v2303 = vpop.xlane.xlu0 %2302
    %v2304 = vadd.f32 %v2293, %v2294
    %2305 = vadd.xlane.f32.xlu0 %v2304
    %v2306 = vpop.xlane.xlu0 %2305
    %v2307 = vmul.f32 %v2277, 0.00390625
    %v2308 = vmul.f32 %v2280, 0.00390625
    %v2309 = vmul.f32 %v2283, 0.00390625
    %v2310 = vmul.f32 %v2286, 0.00390625
    %v2311 = vmul.f32 %v2297, 0.00390625
    %v2312 = vmul.f32 %v2300, 0.00390625
    %v2313 = vmul.f32 %v2303, 0.00390625
    %v2314 = vmul.f32 %v2306, 0.00390625
    %v2315 = vmul.f32 %v2307, %v2307
    %v2316 = vmul.f32 %v2308, %v2308
    %v2317 = vmul.f32 %v2309, %v2309
    %v2318 = vmul.f32 %v2310, %v2310
    %v2319 = vsub.f32 %v2311, %v2315
    %v2320 = vsub.f32 %v2312, %v2316
    %v2321 = vsub.f32 %v2313, %v2317
    %v2322 = vsub.f32 %v2314, %v2318
    %v2323 = vmax.f32 %v2319, 0.0
    %v2324 = vmax.f32 %v2320, 0.0
    %v2325 = vmax.f32 %v2321, 0.0
    %v2326 = vmax.f32 %v2322, 0.0
    %v2327 = vadd.f32 %v2323, 1e-05
    %v2328 = vadd.f32 %v2324, 1e-05
    %v2329 = vadd.f32 %v2325, 1e-05
    %v2330 = vadd.f32 %v2326, 1e-05
    %v2331 = vrsqrt.pop %v2327
    %v2332 = vrsqrt.pop %v2328
    %v2333 = vrsqrt.pop %v2329
    %v2334 = vrsqrt.pop %v2330
    %2336 = vset.pattern.permute.xlu0 0
    %2337 = vperm.xlu0 %2336, %v2267
    %v2338 = vpop.permute.xlu0 %2337
    %2341 = vset.pattern.permute.xlu0 0
    %2342 = vperm.xlu0 %2341, %v2268
    %v2343 = vpop.permute.xlu0 %2342
    %2346 = vset.pattern.permute.xlu0 0
    %2347 = vperm.xlu0 %2346, %v2269
    %v2348 = vpop.permute.xlu0 %2347
    %2351 = vset.pattern.permute.xlu0 0
    %2352 = vperm.xlu0 %2351, %v2270
    %v2353 = vpop.permute.xlu0 %2352
    %2356 = vset.pattern.permute.xlu0 0
    %2357 = vperm.xlu0 %2356, %v2271
    %v2358 = vpop.permute.xlu0 %2357
    %2361 = vset.pattern.permute.xlu0 0
    %2362 = vperm.xlu0 %2361, %v2272
    %v2363 = vpop.permute.xlu0 %2362
    %2366 = vset.pattern.permute.xlu0 0
    %2367 = vperm.xlu0 %2366, %v2273
    %v2368 = vpop.permute.xlu0 %2367
    %2371 = vset.pattern.permute.xlu0 0
    %2372 = vperm.xlu0 %2371, %v2274
    %v2373 = vpop.permute.xlu0 %2372
    %v2376 = vsel %vm360, %v2259, 0
    %v2379 = vsel %vm360, %v2260, 0
    %v2382 = vsel %vm360, %v2261, 0
    %v2385 = vsel %vm360, %v2262, 0
    %v2388 = vsel %vm360, %v2263, 0
    %v2391 = vsel %vm360, %v2264, 0
    %v2394 = vsel %vm360, %v2265, 0
    %v2397 = vsel %vm360, %v2266, 0
    %2399 = vmatprep.subr.mxu0 0.0
    %2400 = vmatpush1.msra.mxu0 0.0
    %2401 = vmatprep.subr.mxu0 0.0
    %2402 = vmatpush1.msra.mxu0 0.0
    %2403 = vmatprep.subr.mxu0 0.0
    %2404 = vmatpush1.msra.mxu0 0.0
    %2405 = vmatprep.subr.mxu0 0.0
    %2406 = vmatpush1.msra.mxu0 0.0
    %2407 = vmatprep.subr.mxu0 0.0
    %2408 = vmatpush1.msra.mxu0 0.0
    %2409 = vmatprep.subr.mxu0 0.0
    %2410 = vmatpush1.msra.mxu0 0.0
    %2411 = vmatprep.subr.mxu0 0.0
    %2412 = vmatpush1.msra.mxu0 0.0
    %2413 = vmatprep.subr.mxu0 0.0
    %2414 = vmatpush1.msra.mxu0 0.0
    %2415 = vmatprep.subr.mxu0 0.0
    %2416 = vmatpush1.msra.mxu0 0.0
    %2417 = vmatprep.subr.mxu0 0.0
    %2418 = vmatpush1.msra.mxu0 0.0
    %2419 = vmatprep.subr.mxu0 0.0
    %2420 = vmatpush1.msra.mxu0 0.0
    %2421 = vmatprep.subr.mxu0 0.0
    %2422 = vmatpush1.msra.mxu0 0.0
    %2423 = vmatprep.subr.mxu0 0.0
    %2424 = vmatpush1.msra.mxu0 0.0
    %2425 = vmatprep.subr.mxu0 0.0
    %2426 = vmatpush1.msra.mxu0 0.0
    %2427 = vmatprep.subr.mxu0 0.0
    %2428 = vmatpush1.msra.mxu0 0.0
    %2429 = vmatprep.subr.mxu0 0.0
    %2430 = vmatpush1.msra.mxu0 %v43
    %2431 = vmatprep.subr.mxu0 0.0
    %2432 = vmatpush2.msra.mxu0 0.0
    %2433 = vmatprep.subr.mxu0 0.0
    %2434 = vmatpush2.msra.mxu0 0.0
    %2435 = vmatprep.subr.mxu0 0.0
    %2436 = vmatpush2.msra.mxu0 0.0
    %2437 = vmatprep.subr.mxu0 0.0
    %2438 = vmatpush2.msra.mxu0 0.0
    %2439 = vmatprep.subr.mxu0 0.0
    %2440 = vmatpush2.msra.mxu0 0.0
    %2441 = vmatprep.subr.mxu0 0.0
    %2442 = vmatpush2.msra.mxu0 0.0
    %2443 = vmatprep.subr.mxu0 0.0
    %2444 = vmatpush2.msra.mxu0 0.0
    %2445 = vmatprep.subr.mxu0 0.0
    %2446 = vmatpush2.msra.mxu0 0.0
    %2447 = vmatprep.subr.mxu0 0.0
    %2448 = vmatpush2.msra.mxu0 0.0
    %2449 = vmatprep.subr.mxu0 0.0
    %2450 = vmatpush2.msra.mxu0 0.0
    %2451 = vmatprep.subr.mxu0 0.0
    %2452 = vmatpush2.msra.mxu0 0.0
    %2453 = vmatprep.subr.mxu0 0.0
    %2454 = vmatpush2.msra.mxu0 0.0
    %2455 = vmatprep.subr.mxu0 0.0
    %2456 = vmatpush2.msra.mxu0 0.0
    %2457 = vmatprep.subr.mxu0 0.0
    %2458 = vmatpush2.msra.mxu0 0.0
    %2459 = vmatprep.subr.mxu0 0.0
    %2460 = vmatpush2.msra.mxu0 0.0
    %2461 = vmatprep.subr.mxu0 0.0
    %2462 = vmatpush2.msra.mxu0 0.0
    %2463 = vmatprep.mubr.f32.mxu0 0.0
    %2464 = vmatmul.mubr.f32.gmra.mxu0 %v2376
    %v2465 = vpop.f32.mrf.mxu0
    %v2466 = vadd.f32 %v2338, %v2465
    %v2467 = vpop.f32.mrf.mxu0
    %2468 = vmatprep.mubr.f32.mxu0 0.0
    %2469 = vmatmul.mubr.f32.gmra.mxu0 %v2379
    %v2470 = vpop.f32.mrf.mxu0
    %v2471 = vadd.f32 %v2343, %v2470
    %v2472 = vpop.f32.mrf.mxu0
    %2473 = vmatprep.mubr.f32.mxu0 0.0
    %2474 = vmatmul.mubr.f32.gmra.mxu0 %v2382
    %v2475 = vpop.f32.mrf.mxu0
    %v2476 = vadd.f32 %v2348, %v2475
    %v2477 = vpop.f32.mrf.mxu0
    %2478 = vmatprep.mubr.f32.mxu0 0.0
    %2479 = vmatmul.mubr.f32.gmra.mxu0 %v2385
    %v2480 = vpop.f32.mrf.mxu0
    %v2481 = vadd.f32 %v2353, %v2480
    %v2482 = vpop.f32.mrf.mxu0
    %2483 = vmatprep.mubr.f32.mxu0 0.0
    %2484 = vmatmul.mubr.f32.gmra.mxu0 %v2388
    %v2485 = vpop.f32.mrf.mxu0
    %v2486 = vadd.f32 %v2358, %v2485
    %v2487 = vpop.f32.mrf.mxu0
    %2488 = vmatprep.mubr.f32.mxu0 0.0
    %2489 = vmatmul.mubr.f32.gmra.mxu0 %v2391
    %v2490 = vpop.f32.mrf.mxu0
    %v2491 = vadd.f32 %v2363, %v2490
    %v2492 = vpop.f32.mrf.mxu0
    %2493 = vmatprep.mubr.f32.mxu0 0.0
    %2494 = vmatmul.mubr.f32.gmra.mxu0 %v2394
    %v2495 = vpop.f32.mrf.mxu0
    %v2496 = vadd.f32 %v2368, %v2495
    %v2497 = vpop.f32.mrf.mxu0
    %2498 = vmatprep.mubr.f32.mxu0 0.0
    %2499 = vmatmul.mubr.f32.gmra.mxu0 %v2397
    %v2500 = vpop.f32.mrf.mxu0
    %v2501 = vadd.f32 %v2373, %v2500
    %v2502 = vpop.f32.mrf.mxu0
    %2503 = vdwg.mxu0
    %v2504 = vmul.f32 %v2466, %v2331
    %v2505 = vmul.f32 %v2471, %v2332
    %v2506 = vmul.f32 %v2476, %v2333
    %v2507 = vmul.f32 %v2481, %v2334
    %v2508 = vmul.f32 %v2307, %v2504
    %v2509 = vmul.f32 %v2308, %v2505
    %v2510 = vmul.f32 %v2309, %v2506
    %v2511 = vmul.f32 %v2310, %v2507
    %v2512 = vsub.f32 %v2486, %v2508
    %v2513 = vsub.f32 %v2491, %v2509
    %v2514 = vsub.f32 %v2496, %v2510
    %v2515 = vsub.f32 %v2501, %v2511
    %v2517 = vsel %vm502, %v2504, 0
    %v2520 = vsel %vm502, %v2505, 0
    %v2523 = vsel %vm502, %v2506, 0
    %v2526 = vsel %vm502, %v2507, 0
    %v2529 = vsel %vm502, %v2512, 0
    %v2532 = vsel %vm502, %v2513, 0
    %v2535 = vsel %vm502, %v2514, 0
    %v2538 = vsel %vm502, %v2515, 0
    %2540 = vmatprep.subr.mxu0 0.0
    %2541 = vmatpush1.msra.mxu0 0.0
    %2542 = vmatprep.subr.mxu0 0.0
    %2543 = vmatpush1.msra.mxu0 0.0
    %2544 = vmatprep.subr.mxu0 0.0
    %2545 = vmatpush1.msra.mxu0 0.0
    %2546 = vmatprep.subr.mxu0 0.0
    %2547 = vmatpush1.msra.mxu0 0.0
    %2548 = vmatprep.subr.mxu0 0.0
    %2549 = vmatpush1.msra.mxu0 0.0
    %2550 = vmatprep.subr.mxu0 0.0
    %2551 = vmatpush1.msra.mxu0 0.0
    %2552 = vmatprep.subr.mxu0 0.0
    %2553 = vmatpush1.msra.mxu0 0.0
    %2554 = vmatprep.subr.mxu0 0.0
    %2555 = vmatpush1.msra.mxu0 0.0
    %2556 = vmatprep.subr.mxu0 0.0
    %2557 = vmatpush1.msra.mxu0 0.0
    %2558 = vmatprep.subr.mxu0 0.0
    %2559 = vmatpush1.msra.mxu0 0.0
    %2560 = vmatprep.subr.mxu0 0.0
    %2561 = vmatpush1.msra.mxu0 0.0
    %2562 = vmatprep.subr.mxu0 0.0
    %2563 = vmatpush1.msra.mxu0 0.0
    %2564 = vmatprep.subr.mxu0 0.0
    %2565 = vmatpush1.msra.mxu0 0.0
    %2566 = vmatprep.subr.mxu0 0.0
    %2567 = vmatpush1.msra.mxu0 0.0
    %2568 = vmatprep.subr.mxu0 0.0
    %2569 = vmatpush1.msra.mxu0 0.0
    %2570 = vmatprep.subr.mxu0 %v532
    %2571 = vmatpush1.msra.mxu0 %v529
    %2572 = vmatprep.subr.mxu0 0.0
    %2573 = vmatpush2.msra.mxu0 0.0
    %2574 = vmatprep.subr.mxu0 0.0
    %2575 = vmatpush2.msra.mxu0 0.0
    %2576 = vmatprep.subr.mxu0 0.0
    %2577 = vmatpush2.msra.mxu0 0.0
    %2578 = vmatprep.subr.mxu0 0.0
    %2579 = vmatpush2.msra.mxu0 0.0
    %2580 = vmatprep.subr.mxu0 0.0
    %2581 = vmatpush2.msra.mxu0 0.0
    %2582 = vmatprep.subr.mxu0 0.0
    %2583 = vmatpush2.msra.mxu0 0.0
    %2584 = vmatprep.subr.mxu0 0.0
    %2585 = vmatpush2.msra.mxu0 0.0
    %2586 = vmatprep.subr.mxu0 0.0
    %2587 = vmatpush2.msra.mxu0 0.0
    %2588 = vmatprep.subr.mxu0 0.0
    %2589 = vmatpush2.msra.mxu0 0.0
    %2590 = vmatprep.subr.mxu0 0.0
    %2591 = vmatpush2.msra.mxu0 0.0
    %2592 = vmatprep.subr.mxu0 0.0
    %2593 = vmatpush2.msra.mxu0 0.0
    %2594 = vmatprep.subr.mxu0 0.0
    %2595 = vmatpush2.msra.mxu0 0.0
    %2596 = vmatprep.subr.mxu0 0.0
    %2597 = vmatpush2.msra.mxu0 0.0
    %2598 = vmatprep.subr.mxu0 0.0
    %2599 = vmatpush2.msra.mxu0 0.0
    %2600 = vmatprep.subr.mxu0 0.0
    %2601 = vmatpush2.msra.mxu0 0.0
    %2602 = vmatprep.subr.mxu0 0.0
    %2603 = vmatpush2.msra.mxu0 0.0
    %2604 = vmatprep.mubr.f32.mxu0 0.0
    %2605 = vmatmul.mubr.f32.gmra.mxu0 %v2517
    %v2606 = vpop.f32.mrf.mxu0
    %v2607 = vadd.f32 0.0, %v2606
    %v2608 = vpop.f32.mrf.mxu0
    %v2609 = vadd.f32 0.0, %v2608
    %2610 = vmatprep.mubr.f32.mxu0 0.0
    %2611 = vmatmul.mubr.f32.gmra.mxu0 %v2520
    %v2612 = vpop.f32.mrf.mxu0
    %v2613 = vadd.f32 0.0, %v2612
    %v2614 = vpop.f32.mrf.mxu0
    %v2615 = vadd.f32 0.0, %v2614
    %2616 = vmatprep.mubr.f32.mxu0 0.0
    %2617 = vmatmul.mubr.f32.gmra.mxu0 %v2523
    %v2618 = vpop.f32.mrf.mxu0
    %v2619 = vadd.f32 0.0, %v2618
    %v2620 = vpop.f32.mrf.mxu0
    %v2621 = vadd.f32 0.0, %v2620
    %2622 = vmatprep.mubr.f32.mxu0 0.0
    %2623 = vmatmul.mubr.f32.gmra.mxu0 %v2526
    %v2624 = vpop.f32.mrf.mxu0
    %v2625 = vadd.f32 0.0, %v2624
    %v2626 = vpop.f32.mrf.mxu0
    %v2627 = vadd.f32 0.0, %v2626
    %2628 = vmatprep.mubr.f32.mxu0 0.0
    %2629 = vmatmul.mubr.f32.gmra.mxu0 %v2529
    %v2630 = vpop.f32.mrf.mxu0
    %v2631 = vadd.f32 0.0, %v2630
    %v2632 = vpop.f32.mrf.mxu0
    %v2633 = vadd.f32 0.0, %v2632
    %2634 = vmatprep.mubr.f32.mxu0 0.0
    %2635 = vmatmul.mubr.f32.gmra.mxu0 %v2532
    %v2636 = vpop.f32.mrf.mxu0
    %v2637 = vadd.f32 0.0, %v2636
    %v2638 = vpop.f32.mrf.mxu0
    %v2639 = vadd.f32 0.0, %v2638
    %2640 = vmatprep.mubr.f32.mxu0 0.0
    %2641 = vmatmul.mubr.f32.gmra.mxu0 %v2535
    %v2642 = vpop.f32.mrf.mxu0
    %v2643 = vadd.f32 0.0, %v2642
    %v2644 = vpop.f32.mrf.mxu0
    %v2645 = vadd.f32 0.0, %v2644
    %2646 = vmatprep.mubr.f32.mxu0 0.0
    %2647 = vmatmul.mubr.f32.gmra.mxu0 %v2538
    %v2648 = vpop.f32.mrf.mxu0
    %v2649 = vadd.f32 0.0, %v2648
    %v2650 = vpop.f32.mrf.mxu0
    %v2651 = vadd.f32 0.0, %v2650
    %2652 = vdwg.mxu0
    %v2653 = vmul.f32 %v2251, %v2607
    %v2654 = vmul.f32 %v2252, %v2609
    %v2655 = vmul.f32 %v2253, %v2613
    %v2656 = vmul.f32 %v2254, %v2615
    %v2657 = vmul.f32 %v2255, %v2619
    %v2658 = vmul.f32 %v2256, %v2621
    %v2659 = vmul.f32 %v2257, %v2625
    %v2660 = vmul.f32 %v2258, %v2627
    %v2661 = vadd.f32 %v2653, %v2631
    %v2662 = vadd.f32 %v2654, %v2633
    %v2663 = vadd.f32 %v2655, %v2637
    %v2664 = vadd.f32 %v2656, %v2639
    %v2665 = vadd.f32 %v2657, %v2643
    %v2666 = vadd.f32 %v2658, %v2645
    %v2667 = vadd.f32 %v2659, %v2649
    %v2668 = vadd.f32 %v2660, %v2651
    %v2669 = vmax.f32 %v2661, 0.0
    %v2670 = vmax.f32 %v2662, 0.0
    %v2671 = vmax.f32 %v2663, 0.0
    %v2672 = vmax.f32 %v2664, 0.0
    %v2673 = vmax.f32 %v2665, 0.0
    %v2674 = vmax.f32 %v2666, 0.0
    %v2675 = vmax.f32 %v2667, 0.0
    %v2676 = vmax.f32 %v2668, 0.0
    %v2677 = vld [vmem:[%s9] sm:$0xff]
    %v2678 = vld [vmem:[%s9 + $0x8] sm:$0xff]
    %v2679 = vld [vmem:[%s9 + $0x10] sm:$0xff]
    %v2680 = vld [vmem:[%s9 + $0x18] sm:$0xff]
    %2682 = vset.pattern.permute.xlu0 0
    %2683 = vperm.xlu0 %2682, %v2677
    %v2684 = vpop.permute.xlu0 %2683
    %2687 = vset.pattern.permute.xlu0 0
    %2688 = vperm.xlu0 %2687, %v2678
    %v2689 = vpop.permute.xlu0 %2688
    %2692 = vset.pattern.permute.xlu0 0
    %2693 = vperm.xlu0 %2692, %v2679
    %v2694 = vpop.permute.xlu0 %2693
    %2697 = vset.pattern.permute.xlu0 0
    %2698 = vperm.xlu0 %2697, %v2680
    %v2699 = vpop.permute.xlu0 %2698
    %v2701 = vmul.f32 %v2669, %v2684
    %v2702 = vmul.f32 %v2670, %v2684
    %v2703 = vmul.f32 %v2671, %v2689
    %v2704 = vmul.f32 %v2672, %v2689
    %v2705 = vmul.f32 %v2673, %v2694
    %v2706 = vmul.f32 %v2674, %v2694
    %v2707 = vmul.f32 %v2675, %v2699
    %v2708 = vmul.f32 %v2676, %v2699
    %v2709 = vadd.f32 %v2701, %v2703
    %v2710 = vadd.f32 %v2709, %v2705
    %v2711 = vadd.f32 %v2710, %v2707
    %v2712 = vrot.slane %v2711, 4
    %v2713 = vadd.f32 %v2711, %v2712
    %v2714 = vrot.slane %v2713, 2
    %v2715 = vadd.f32 %v2713, %v2714
    %v2716 = vrot.slane %v2715, 1
    %v2717 = vadd.f32 %v2715, %v2716
    %v2718 = vadd.f32 %v2702, %v2704
    %v2719 = vadd.f32 %v2718, %v2706
    %v2720 = vadd.f32 %v2719, %v2708
    %v2721 = vrot.slane %v2720, 4
    %v2722 = vadd.f32 %v2720, %v2721
    %v2723 = vrot.slane %v2722, 2
    %v2724 = vadd.f32 %v2722, %v2723
    %v2725 = vrot.slane %v2724, 1
    %v2726 = vadd.f32 %v2724, %v2725
    %v2727 = vld [vmem:[#allocation2] sm:$0x1]
    %2729 = vset.pattern.permute.xlu0 0
    %2730 = vperm.xlu0 %2729, %v2727
    %v2731 = vpop.permute.xlu0 %2730
    %v2733 = vlaneseq
    %v2734 = vshrl.u32 %v2733, 7
    %v2735 = vsub.s32 0, %v2734
    %v2736 = vrot.slane %v2731, %v2735
    %v2737 = vadd.f32 %v2717, %v2736
    %v2738 = vadd.f32 %v2726, %v2736
    %v2739 = vxor.u32 %v2737, 2147483648
    %v2740 = vxor.u32 %v2738, 2147483648
    %v2741 = vmul.f32 %v2739, 1.442695
    %v2742 = vpow.pop %v2741
    %v2743 = vmul.f32 %v2740, 1.442695
    %v2744 = vpow.pop %v2743
    %v2745 = vadd.f32 %v2742, 1.0
    %v2746 = vadd.f32 %v2744, 1.0
    %v2747 = vrcp.pop %v2745
    %v2748 = vmul.f32 1.0, %v2747
    %v2749 = vrcp.pop %v2746
    %v2750 = vmul.f32 1.0, %v2749
    %v2753 = vcombine.low %v2748, %v2750
    %v2755 = vunpack.c.l.s4 1966171168
    %v2756 = vunpack.c.0.s8 %v2755
    %v2757 = vlaneseq
    %v2758 = vshrl.u32 %v2757, 7
    %v2759 = vsub.s32 %v2756, %v2758
    %v2760 = vrot.slane %v2753, %v2759
    %v2762 = vunpack.c.l.s4 1966171168
    %v2763 = vunpack.c.0.s8 %v2762
    %v2764 = vlaneseq
    %v2765 = vshrl.u32 %v2764, 7
    %v2766 = vsub.s32 %v2763, %v2765
    %v2767 = vrot.slane %v2760, %v2766
    %v2769 = vlaneseq
    %vm2770 = vcmp.ge.s32.totalorder %v2769, 0
    %vm2771 = vcmp.lt.s32.totalorder %v2769, 256
    %vm2772 = vmand %vm2770, %vm2771
    %2773 = vst.msk [vmem:[#allocation3] sm:$0x3] %vm2772, %v2767
    // Predicated region
    $region46: #{tpu_custom_call.1} parent=1 // pred_check
      _
    $region47: #{tpu_custom_call.1} parent=1 // pred_check_branch
      %2775 = sbr.rel (0) target = $region49
    $region48: #{tpu_custom_call.1} parent=1 // pred_region
      %s2777 = ssub.s32 32, 32
      %2778 = vsyncadd [#allocation4], %s2777
      %s2780 = sshll.u32 [#allocation3], 4
      %s2781 = int_to_ptr.vmem [resolvable:$true] %s2780
      %2783 = dma.vmem_to_hbm [thread:$0]  %s2781, 32, %s11, [#allocation4]
    $region49: #{tpu_custom_call.1} parent=1 // pred_fallthru
      _
    // Predicated region
    $region50: #{tpu_custom_call.1} parent=1 // pred_check
      _
    $region51: #{tpu_custom_call.1} parent=1 // pred_check_branch
      %2785 = sbr.rel (0) target = $region53
    $region52: #{tpu_custom_call.1} parent=1 // pred_region
      %2786 = dma.done [#allocation4], 32
    $region53: #{tpu_custom_call.1} parent=1 // pred_fallthru
      _
    %2787 = vsyncpa [#allocation4], 1

</llo_original>
